<compile_context>
chip_gen: v7x
topology: tpu7x:2x2x1
jax: 0.10.0
libtpu: 0.0.40
codegen_flags: <defaults>
</compile_context>

<pallas_src>
import functools

import jax
import jax.numpy as jnp
from jax.experimental import pallas as pl
from jax.experimental.pallas import tpu as pltpu


def _round_up(x, m):
    return ((x + m - 1) // m) * m


def lstm_kernel(x_ref, wih_ref, whh_ref, b_ref, wfc_ref, bfc_ref,
                out_ref, pre_ref, h_ref, c_ref, *,
                hidden_pad, seq_len, time_chunk, unroll_time):
    """One (batch-tile, time-step) grid step.

    Grid time axis has (num_chunks + 1) steps: step t projects chunk t
    (t < last) and runs the recurrence for chunk t-1 (t > 0); the last step
    additionally applies the final Linear to the carried hidden state.
    """
    Hp = hidden_pad
    Tc = time_chunk
    _, Bb, D = x_ref.shape

    t = pl.program_id(1)
    last = pl.num_programs(1) - 1          # == number of time chunks
    slot = t % 2                           # pre slab written this step
    read_slot = 1 - slot                   # pre slab written last step

    # --- first step of each batch tile: zero-init the carried state ---------
    @pl.when(t == 0)
    def _():
        h_ref[...] = jnp.zeros_like(h_ref)
        c_ref[...] = jnp.zeros_like(c_ref)

    # --- hoisted input projection for chunk t (skewed one step ahead) -------
    # One (Tc*Bb, D) @ (D, 4Hp) MXU matmul, bias folded in once.  It is
    # independent of the recurrence below (disjoint pre slab slot), so it can
    # overlap / pipeline with the EUP/VPU-bound recurrence for chunk t-1.
    @pl.when(t < last)
    def _():
        x = x_ref[...].reshape(Tc * Bb, D)
        pre = (jnp.dot(x, wih_ref[...], preferred_element_type=jnp.float32)
               + b_ref[...])
        pre_ref[slot] = pre.reshape(Tc, Bb, 4 * Hp)

    # --- serial recurrence for chunk t-1 -------------------------------------
    @pl.when(t > 0)
    def _():
        W_hh = whh_ref[...]                # (Hp, 4Hp), resident across steps
        chunk = t - 1                      # which time chunk is consumed

        def step(s, carry):
            h, c = carry
            gates = (pre_ref[read_slot, s]
                     + jnp.dot(h.astype(W_hh.dtype), W_hh,
                               preferred_element_type=jnp.float32))
            # gate order [i, f, o, g]: one sigmoid over 3Hp, one tanh over Hp.
            sig = jax.nn.sigmoid(gates[:, :3 * Hp])
            g_g = jnp.tanh(gates[:, 3 * Hp:])
            i_g = sig[:, 0 * Hp:1 * Hp]
            f_g = sig[:, 1 * Hp:2 * Hp]
            o_g = sig[:, 2 * Hp:3 * Hp]
            c_new = f_g * c + i_g * g_g
            h_new = o_g * jnp.tanh(c_new)
            if seq_len % Tc != 0:
                # T not chunk-aligned: freeze state on padded timesteps.
                valid = (chunk * Tc + s) < seq_len
                h_new = jnp.where(valid, h_new, h)
                c_new = jnp.where(valid, c_new, c)
            return h_new, c_new

        h0 = h_ref[...]
        c0 = c_ref[...]
        if unroll_time:
            # Small tiles: full static unroll gives the scheduler visibility.
            h, c = h0, c0
            for s in range(Tc):
                h, c = step(s, (h, c))
        else:
            # Large tiles: bound live ranges with a partially unrolled loop.
            h, c = jax.lax.fori_loop(0, Tc, step, (h0, c0), unroll=2)
        h_ref[...] = h
        c_ref[...] = c

    # --- last grid step: final Linear on last hidden state (lane-dense) -----
    @pl.when(t == last)
    def _():
        out_ref[...] = (jnp.dot(h_ref[...], wfc_ref[...],
                                preferred_element_type=jnp.float32)
                        + bfc_ref[...])


def _to_kernel_params(params, Hp, Op, compute_dtype):
    """PyTorch-layout params -> kernel layout.

    Reorders the 4H gate axis from PyTorch's [i, f, g, o] to [i, f, o, g],
    zero-pads each gate block H -> Hp (lane alignment), transposes weights to
    (in, out) matmul layout, combines the two LSTM biases, and pads the FC
    output to Op.
    """
    W_ih = params["W_ih"]                    # (4H, D)
    W_hh = params["W_hh"]                    # (4H, H)
    b = params["b_ih"] + params["b_hh"]      # (4H,)
    W_fc = params["W_fc"]                    # (O, H)
    b_fc = params["b_fc"]                    # (O,)
    H = W_hh.shape[1]
    O = W_fc.shape[0]

    def regate(w):                           # [i,f,g,o] -> [i,f,o,g], pad gates
        i, f, g, o = jnp.split(w, 4, axis=0)
        pad = [(0, Hp - H)] + [(0, 0)] * (w.ndim - 1)
        return jnp.concatenate([jnp.pad(blk, pad) for blk in (i, f, o, g)],
                               axis=0)

    W_ih_k = regate(W_ih).T                                     # (D, 4Hp)
    W_hh_k = jnp.pad(regate(W_hh), ((0, 0), (0, Hp - H))).T     # (Hp, 4Hp)
    b_k = regate(b).reshape(1, 4 * Hp)                          # (1, 4Hp)
    W_fc_k = jnp.pad(W_fc, ((0, Op - O), (0, Hp - H))).T        # (Hp, Op)
    b_fc_k = jnp.pad(b_fc, (0, Op - O)).reshape(1, Op)          # (1, Op)
    return (W_ih_k.astype(compute_dtype), W_hh_k.astype(compute_dtype),
            b_k.astype(jnp.float32), W_fc_k.astype(jnp.float32),
            b_fc_k.astype(jnp.float32))


def lstm_forward(x, params, *, time_chunk=None, compute_dtype=jnp.bfloat16,
                 unroll_time=None):
    """x: (B, T, D) batch-first (PyTorch convention). Returns (B, output_size).

    `params` are PyTorch-layout (see init_params). compute_dtype is the MXU
    operand dtype (bf16 recommended on v6e/v7x); accumulation is always f32.
    """
    B, T, D = x.shape
    H = params["W_hh"].shape[1]
    O = params["W_fc"].shape[0]

    Hp = _round_up(H, 128)                 # lane-dense gates / h / c
    Op = _round_up(O, 128)                 # lane-dense FC output

    # Batch tiling: sublane-aligned, <=128 rows, and >=2 tiles when there is
    # enough batch so the "parallel" axis feeds both v7x TensorCores.
    Bp0 = _round_up(max(B, 8), 8)
    Bb = min(Bp0, 128)
    if Bp0 >= 16 and Bp0 // Bb < 2:
        Bb = _round_up((Bp0 + 1) // 2, 8)
    Bp = _round_up(Bp0, Bb)

    # Time chunking: cap at 16 (v7x VMEM budget); pad T up, mask in-kernel.
    Tc = max(1, min(T, 16)) if time_chunk is None else int(time_chunk)
    Tp = _round_up(T, Tc)
    nt = Tp // Tc
    nb = Bp // Bb

    if unroll_time is None:
        # Full unroll only while the per-chunk gates footprint stays small.
        unroll_time = (Tc * Bb * 4 * Hp * 4) <= (1 << 20)

    # Inputs: pad batch, go time-major, pad time by (chunk-align + one dummy
    # skew chunk), cast MXU operand dtype.
    x_p = jnp.pad(x, ((0, Bp - B), (0, 0), (0, 0))).astype(compute_dtype)
    x_p = jnp.transpose(x_p, (1, 0, 2))                       # (T, Bp, D)
    x_p = jnp.pad(x_p, ((0, Tp - T + Tc), (0, 0), (0, 0)))    # (Tp+Tc, Bp, D)

    W_ih_k, W_hh_k, b_k, W_fc_k, b_fc_k = _to_kernel_params(
        params, Hp, Op, compute_dtype)

    # Explicit VMEM budget (fits v7x 64 MiB / raises v5e's 16 MiB default).
    itemsz = jnp.dtype(compute_dtype).itemsize
    need = (2 * Tc * Bb * D * itemsz                       # x (double-buffered)
            + (D * 4 * Hp + Hp * 4 * Hp) * itemsz          # W_ih, W_hh (x1)
            + (4 * Hp + Hp * Op + Op) * 4                  # b, W_fc, b_fc
            + (2 * Tc * Bb * 4 * Hp + 2 * Bb * Hp) * 4     # pre + h + c scratch
            + 2 * Bb * Op * 4)                             # out block
    vmem_limit = int(min(56 * 2**20, max(16 * 2**20, 2 * need)))

    kernel = functools.partial(lstm_kernel, hidden_pad=Hp, seq_len=T,
                               time_chunk=Tc, unroll_time=unroll_time)
    const = pl.Buffered(1)   # resident weights: no pointless double-buffering

    out = pl.pallas_call(
        kernel,
        out_shape=jax.ShapeDtypeStruct((Bp, Op), jnp.float32),
        grid_spec=pltpu.PrefetchScalarGridSpec(
            num_scalar_prefetch=0,
            grid=(nb, nt + 1),                 # +1 step for the skewed drain
            in_specs=[
                # streamed time-major x chunks
                pl.BlockSpec((Tc, Bb, D), lambda b, t: (t, b, 0)),
                # resident weights / biases (constant block index)
                pl.BlockSpec((D, 4 * Hp), lambda b, t: (0, 0),
                             pipeline_mode=const),
                pl.BlockSpec((Hp, 4 * Hp), lambda b, t: (0, 0),
                             pipeline_mode=const),
                pl.BlockSpec((1, 4 * Hp), lambda b, t: (0, 0),
                             pipeline_mode=const),
                pl.BlockSpec((Hp, Op), lambda b, t: (0, 0),
                             pipeline_mode=const),
                pl.BlockSpec((1, Op), lambda b, t: (0, 0),
                             pipeline_mode=const),
            ],
            out_specs=pl.BlockSpec((Bb, Op), lambda b, t: (b, 0)),
            scratch_shapes=[
                pltpu.VMEM((2, Tc, Bb, 4 * Hp), jnp.float32),  # skewed pre
                pltpu.VMEM((Bb, Hp), jnp.float32),             # h carry
                pltpu.VMEM((Bb, Hp), jnp.float32),             # c carry
            ]),
        compiler_params=pltpu.CompilerParams(
            dimension_semantics=("parallel", "arbitrary"),
            vmem_limit_bytes=vmem_limit),
    )(x_p, W_ih_k, W_hh_k, b_k, W_fc_k, b_fc_k)

    return out[:B, :O]


def init_params(key, input_size, hidden_size, output_size):
    """PyTorch-layout params with nn.LSTM-style uniform(-1/sqrt(H), 1/sqrt(H))."""
    ks = jax.random.split(key, 6)
    k = 1.0 / jnp.sqrt(jnp.float32(hidden_size))
    u = lambda kk, shape: jax.random.uniform(kk, shape, jnp.float32, -k, k)
    return {
        "W_ih": u(ks[0], (4 * hidden_size, input_size)),   # (4H, D)
        "W_hh": u(ks[1], (4 * hidden_size, hidden_size)),  # (4H, H)
        "b_ih": u(ks[2], (4 * hidden_size,)),
        "b_hh": u(ks[3], (4 * hidden_size,)),
        "W_fc": u(ks[4], (output_size, hidden_size)),      # (O, H)
        "b_fc": u(ks[5], (output_size,)),
    }


def lstm_reference(x, params):
    """Pure-JAX f32 reference of the PyTorch forward (gate order [i,f,g,o])."""
    B, T, D = x.shape
    H = params["W_hh"].shape[1]
    b = params["b_ih"] + params["b_hh"]
    h = jnp.zeros((B, H), jnp.float32)
    c = jnp.zeros((B, H), jnp.float32)
    for t in range(T):
        gates = x[:, t, :] @ params["W_ih"].T + h @ params["W_hh"].T + b
        i_g = jax.nn.sigmoid(gates[:, 0 * H:1 * H])
        f_g = jax.nn.sigmoid(gates[:, 1 * H:2 * H])
        g_g = jnp.tanh(gates[:, 2 * H:3 * H])
        o_g = jax.nn.sigmoid(gates[:, 3 * H:4 * H])
        c = f_g * c + i_g * g_g
        h = o_g * jnp.tanh(c)
    return h @ params["W_fc"].T + params["b_fc"]


if __name__ == "__main__":
    B, T = 2, 16
    input_size, hidden_size, output_size = 16, 32, 4

    key = jax.random.PRNGKey(0)
    k_x, k_p, k_x2 = jax.random.split(key, 3)
    x = jax.random.normal(k_x, (B, T, input_size), jnp.float32)
    params = init_params(k_p, input_size, hidden_size, output_size)
    ref = lstm_reference(x, params)

    # 1) f32 MXU operands, unrolled recurrence (tight numeric check);
    #    time_chunk=8 -> two chunks, exercising the skewed pre + h/c carry.
    out = lstm_forward(x, params, time_chunk=8,
                       compute_dtype=jnp.float32, unroll_time=True)
    out = jax.block_until_ready(out)
    assert out.shape == (B, output_size)
    assert jnp.allclose(out, ref, atol=1e-4, rtol=1e-4), (
        float(jnp.max(jnp.abs(out - ref))))

    # 2) bf16 MXU operands + fori_loop recurrence (perf config, looser tol).
    out_bf = lstm_forward(x, params, time_chunk=8,
                          compute_dtype=jnp.bfloat16, unroll_time=False)
    out_bf = jax.block_until_ready(out_bf)
    assert jnp.allclose(out_bf, ref, atol=5e-2, rtol=5e-2), (
        float(jnp.max(jnp.abs(out_bf - ref))))

    # 3) T not chunk-aligned -> in-kernel padded-timestep masking path.
    T2 = 12
    x2 = jax.random.normal(k_x2, (B, T2, input_size), jnp.float32)
    ref2 = lstm_reference(x2, params)
    out2 = lstm_forward(x2, params, time_chunk=8, compute_dtype=jnp.float32)
    out2 = jax.block_until_ready(out2)
    assert jnp.allclose(out2, ref2, atol=1e-4, rtol=1e-4), (
        float(jnp.max(jnp.abs(out2 - ref2))))

    print("KERNEL_OK")
</pallas_src>

<mosaic_0001>
module attributes {stable_mosaic.version = 11 : i64} {
  func.func @lstm_kernel(%arg0: i32, %arg1: i32, %arg2: memref<8x8x16xf32, #tpu.memory_space<vmem>>, %arg3: memref<16x512xf32, #tpu.memory_space<vmem>>, %arg4: memref<128x512xf32, #tpu.memory_space<vmem>>, %arg5: memref<1x512xf32, #tpu.memory_space<vmem>>, %arg6: memref<128x128xf32, #tpu.memory_space<vmem>>, %arg7: memref<1x128xf32, #tpu.memory_space<vmem>>, %arg8: memref<8x128xf32, #tpu.memory_space<vmem>>, %arg9: memref<2x8x8x512xf32, #tpu.memory_space<vmem>>, %arg10: memref<8x128xf32, #tpu.memory_space<vmem>>, %arg11: memref<8x128xf32, #tpu.memory_space<vmem>>) attributes {dimension_semantics = [#tpu.dimension_semantics<parallel>, #tpu.dimension_semantics<arbitrary>], iteration_bounds = array<i64: 1, 3>, scalar_prefetch = 0 : i64, scratch_operands = 3 : i64, tpu.core_type = #tpu.core_type<tc>, window_params = [{transform_indices = @transform_0, window_bounds = array<i64: 8, 8, 16>}, {pipeline_mode = #tpu.pipeline_mode<synchronous>, transform_indices = @transform_1, window_bounds = array<i64: 16, 512>}, {pipeline_mode = #tpu.pipeline_mode<synchronous>, transform_indices = @transform_2, window_bounds = array<i64: 128, 512>}, {pipeline_mode = #tpu.pipeline_mode<synchronous>, transform_indices = @transform_3, window_bounds = array<i64: 1, 512>}, {pipeline_mode = #tpu.pipeline_mode<synchronous>, transform_indices = @transform_4, window_bounds = array<i64: 128, 128>}, {pipeline_mode = #tpu.pipeline_mode<synchronous>, transform_indices = @transform_5, window_bounds = array<i64: 1, 128>}, {transform_indices = @transform_6, window_bounds = array<i64: 8, 128>}]} {
    %c2_i32 = arith.constant 2 : i32
    %c0_i32 = arith.constant 0 : i32
    %0 = arith.cmpi eq, %c2_i32, %c0_i32 : i32
    %c1_i32 = arith.constant 1 : i32
    %1 = arith.select %0, %c1_i32, %c2_i32 : i32
    %2 = arith.remsi %arg1, %1 : i32
    %c0_i32_0 = arith.constant 0 : i32
    %3 = arith.cmpi ne, %2, %c0_i32_0 : i32
    %c0_i32_1 = arith.constant 0 : i32
    %4 = arith.cmpi slt, %2, %c0_i32_1 : i32
    %c0_i32_2 = arith.constant 0 : i32
    %5 = arith.cmpi slt, %1, %c0_i32_2 : i32
    %6 = arith.xori %4, %5 : i1
    %7 = arith.andi %6, %3 : i1
    %8 = arith.addi %2, %1 : i32
    %9 = arith.select %7, %8, %2 : i32
    %c1_i32_3 = arith.constant 1 : i32
    %10 = arith.subi %c1_i32_3, %9 : i32
    %c0_i32_4 = arith.constant 0 : i32
    %11 = arith.cmpi eq, %arg1, %c0_i32_4 : i32
    %12 = arith.extui %11 : i1 to i32
    %c0_i32_5 = arith.constant 0 : i32
    %13 = arith.cmpi ne, %12, %c0_i32_5 : i32
    scf.if %13 {
      %cst = arith.constant 0.000000e+00 : f32
      %23 = vector.broadcast %cst : f32 to vector<8x128xf32>
      %c0 = arith.constant 0 : index
      %c0_12 = arith.constant 0 : index
      %24 = vector.load %arg10[%c0, %c0_12] : memref<8x128xf32, #tpu.memory_space<vmem>>, vector<8x128xf32>
      tpu.vector_store %arg10[%c0, %c0_12], %23 {strides = array<i32>} : memref<8x128xf32, #tpu.memory_space<vmem>>, vector<8x128xf32>,
      %cst_13 = arith.constant 0.000000e+00 : f32
      %25 = vector.broadcast %cst_13 : f32 to vector<8x128xf32>
      %c0_14 = arith.constant 0 : index
      %c0_15 = arith.constant 0 : index
      %26 = vector.load %arg11[%c0_14, %c0_15] : memref<8x128xf32, #tpu.memory_space<vmem>>, vector<8x128xf32>
      tpu.vector_store %arg11[%c0_14, %c0_15], %25 {strides = array<i32>} : memref<8x128xf32, #tpu.memory_space<vmem>>, vector<8x128xf32>,
    } else {
    }
    %c2_i32_6 = arith.constant 2 : i32
    %14 = arith.cmpi slt, %arg1, %c2_i32_6 : i32
    %15 = arith.extui %14 : i1 to i32
    %c0_i32_7 = arith.constant 0 : i32
    %16 = arith.cmpi ne, %15, %c0_i32_7 : i32
    scf.if %16 {
      %c0 = arith.constant 0 : index
      %c0_12 = arith.constant 0 : index
      %c0_13 = arith.constant 0 : index
      %23 = vector.load %arg2[%c0, %c0_12, %c0_13] : memref<8x8x16xf32, #tpu.memory_space<vmem>>, vector<8x8x16xf32>
      %24 = vector.shape_cast %23 : vector<8x8x16xf32> to vector<64x16xf32>
      %c0_14 = arith.constant 0 : index
      %c0_15 = arith.constant 0 : index
      %25 = vector.load %arg3[%c0_14, %c0_15] : memref<16x512xf32, #tpu.memory_space<vmem>>, vector<16x512xf32>
      %cst = arith.constant dense<0.000000e+00> : vector<64x512xf32>
      %26 = tpu.matmul %24, %25, %cst {dimension_numbers = #tpu.dot_dimension_numbers<[1], [0], [0], [1], [0, 0, 1, 1], [], []>} : vector<64x16xf32>, vector<16x512xf32>, vector<64x512xf32> -> vector<64x512xf32>
      %c0_16 = arith.constant 0 : index
      %c0_17 = arith.constant 0 : index
      %27 = vector.load %arg5[%c0_16, %c0_17] : memref<1x512xf32, #tpu.memory_space<vmem>>, vector<1x512xf32>
      %28 = vector.broadcast %27 : vector<1x512xf32> to vector<64x512xf32>
      %29 = arith.addf %26, %28 : vector<64x512xf32>
      %30 = vector.shape_cast %29 : vector<64x512xf32> to vector<8x8x512xf32>
      %31 = arith.index_cast %9 : i32 to index
      %c0_18 = arith.constant 0 : index
      %c0_19 = arith.constant 0 : index
      %c0_20 = arith.constant 0 : index
      %32 = vector.load %arg9[%31, %c0_18, %c0_19, %c0_20] : memref<2x8x8x512xf32, #tpu.memory_space<vmem>>, vector<1x8x8x512xf32>
      %33 = vector.shape_cast %32 : vector<1x8x8x512xf32> to vector<8x8x512xf32>
      %34 = vector.shape_cast %30 : vector<8x8x512xf32> to vector<1x8x8x512xf32>
      tpu.vector_store %arg9[%31, %c0_18, %c0_19, %c0_20], %34 {strides = array<i32>} : memref<2x8x8x512xf32, #tpu.memory_space<vmem>>, vector<1x8x8x512xf32>,
    } else {
    }
    %c0_i32_8 = arith.constant 0 : i32
    %17 = arith.cmpi sgt, %arg1, %c0_i32_8 : i32
    %18 = arith.extui %17 : i1 to i32
    %c0_i32_9 = arith.constant 0 : i32
    %19 = arith.cmpi ne, %18, %c0_i32_9 : i32
    scf.if %19 {
      %c0 = arith.constant 0 : index
      %c0_12 = arith.constant 0 : index
      %23 = vector.load %arg4[%c0, %c0_12] : memref<128x512xf32, #tpu.memory_space<vmem>>, vector<128x512xf32>
      %c0_13 = arith.constant 0 : index
      %c0_14 = arith.constant 0 : index
      %24 = vector.load %arg10[%c0_13, %c0_14] : memref<8x128xf32, #tpu.memory_space<vmem>>, vector<8x128xf32>
      %c0_15 = arith.constant 0 : index
      %c0_16 = arith.constant 0 : index
      %25 = vector.load %arg11[%c0_15, %c0_16] : memref<8x128xf32, #tpu.memory_space<vmem>>, vector<8x128xf32>
      %26 = arith.index_cast %10 : i32 to index
      %c0_17 = arith.constant 0 : index
      %c0_18 = arith.constant 0 : index
      %c0_19 = arith.constant 0 : index
      %27 = vector.load %arg9[%26, %c0_17, %c0_18, %c0_19] : memref<2x8x8x512xf32, #tpu.memory_space<vmem>>, vector<1x1x8x512xf32>
      %28 = vector.shape_cast %27 : vector<1x1x8x512xf32> to vector<8x512xf32>
      %cst = arith.constant dense<0.000000e+00> : vector<8x512xf32>
      %29 = tpu.matmul %24, %23, %cst {dimension_numbers = #tpu.dot_dimension_numbers<[1], [0], [0], [1], [0, 0, 1, 1], [], []>} : vector<8x128xf32>, vector<128x512xf32>, vector<8x512xf32> -> vector<8x512xf32>
      %30 = arith.addf %28, %29 : vector<8x512xf32>
      %31 = vector.extract_strided_slice %30 {offsets = [0, 0], sizes = [8, 384], strides = [1, 1]} : vector<8x512xf32> to vector<8x384xf32>
      %32 = arith.negf %31 : vector<8x384xf32>
      %33 = math.exp %32 : vector<8x384xf32>
      %cst_20 = arith.constant 1.000000e+00 : f32
      %34 = vector.broadcast %cst_20 : f32 to vector<8x384xf32>
      %35 = arith.addf %34, %33 : vector<8x384xf32>
      %36 = arith.divf %34, %35 : vector<8x384xf32>
      %37 = vector.extract_strided_slice %30 {offsets = [0, 384], sizes = [8, 128], strides = [1, 1]} : vector<8x512xf32> to vector<8x128xf32>
      %38 = math.tanh %37 : vector<8x128xf32>
      %39 = vector.extract_strided_slice %36 {offsets = [0, 0], sizes = [8, 128], strides = [1, 1]} : vector<8x384xf32> to vector<8x128xf32>
      %40 = vector.extract_strided_slice %36 {offsets = [0, 128], sizes = [8, 128], strides = [1, 1]} : vector<8x384xf32> to vector<8x128xf32>
      %41 = vector.extract_strided_slice %36 {offsets = [0, 256], sizes = [8, 128], strides = [1, 1]} : vector<8x384xf32> to vector<8x128xf32>
      %42 = arith.mulf %40, %25 : vector<8x128xf32>
      %43 = arith.mulf %39, %38 : vector<8x128xf32>
      %44 = arith.addf %42, %43 : vector<8x128xf32>
      %45 = math.tanh %44 : vector<8x128xf32>
      %46 = arith.mulf %41, %45 : vector<8x128xf32>
      %47 = arith.index_cast %10 : i32 to index
      %c1 = arith.constant 1 : index
      %c0_21 = arith.constant 0 : index
      %c0_22 = arith.constant 0 : index
      %48 = vector.load %arg9[%47, %c1, %c0_21, %c0_22] : memref<2x8x8x512xf32, #tpu.memory_space<vmem>>, vector<1x1x8x512xf32>
      %49 = vector.shape_cast %48 : vector<1x1x8x512xf32> to vector<8x512xf32>
      %cst_23 = arith.constant dense<0.000000e+00> : vector<8x512xf32>
      %50 = tpu.matmul %46, %23, %cst_23 {dimension_numbers = #tpu.dot_dimension_numbers<[1], [0], [0], [1], [0, 0, 1, 1], [], []>} : vector<8x128xf32>, vector<128x512xf32>, vector<8x512xf32> -> vector<8x512xf32>
      %51 = arith.addf %49, %50 : vector<8x512xf32>
      %52 = vector.extract_strided_slice %51 {offsets = [0, 0], sizes = [8, 384], strides = [1, 1]} : vector<8x512xf32> to vector<8x384xf32>
      %53 = arith.negf %52 : vector<8x384xf32>
      %54 = math.exp %53 : vector<8x384xf32>
      %cst_24 = arith.constant 1.000000e+00 : f32
      %55 = vector.broadcast %cst_24 : f32 to vector<8x384xf32>
      %56 = arith.addf %55, %54 : vector<8x384xf32>
      %57 = arith.divf %55, %56 : vector<8x384xf32>
      %58 = vector.extract_strided_slice %51 {offsets = [0, 384], sizes = [8, 128], strides = [1, 1]} : vector<8x512xf32> to vector<8x128xf32>
      %59 = math.tanh %58 : vector<8x128xf32>
      %60 = vector.extract_strided_slice %57 {offsets = [0, 0], sizes = [8, 128], strides = [1, 1]} : vector<8x384xf32> to vector<8x128xf32>
      %61 = vector.extract_strided_slice %57 {offsets = [0, 128], sizes = [8, 128], strides = [1, 1]} : vector<8x384xf32> to vector<8x128xf32>
      %62 = vector.extract_strided_slice %57 {offsets = [0, 256], sizes = [8, 128], strides = [1, 1]} : vector<8x384xf32> to vector<8x128xf32>
      %63 = arith.mulf %61, %44 : vector<8x128xf32>
      %64 = arith.mulf %60, %59 : vector<8x128xf32>
      %65 = arith.addf %63, %64 : vector<8x128xf32>
      %66 = math.tanh %65 : vector<8x128xf32>
      %67 = arith.mulf %62, %66 : vector<8x128xf32>
      %68 = arith.index_cast %10 : i32 to index
      %c2 = arith.constant 2 : index
      %c0_25 = arith.constant 0 : index
      %c0_26 = arith.constant 0 : index
      %69 = vector.load %arg9[%68, %c2, %c0_25, %c0_26] : memref<2x8x8x512xf32, #tpu.memory_space<vmem>>, vector<1x1x8x512xf32>
      %70 = vector.shape_cast %69 : vector<1x1x8x512xf32> to vector<8x512xf32>
      %cst_27 = arith.constant dense<0.000000e+00> : vector<8x512xf32>
      %71 = tpu.matmul %67, %23, %cst_27 {dimension_numbers = #tpu.dot_dimension_numbers<[1], [0], [0], [1], [0, 0, 1, 1], [], []>} : vector<8x128xf32>, vector<128x512xf32>, vector<8x512xf32> -> vector<8x512xf32>
      %72 = arith.addf %70, %71 : vector<8x512xf32>
      %73 = vector.extract_strided_slice %72 {offsets = [0, 0], sizes = [8, 384], strides = [1, 1]} : vector<8x512xf32> to vector<8x384xf32>
      %74 = arith.negf %73 : vector<8x384xf32>
      %75 = math.exp %74 : vector<8x384xf32>
      %cst_28 = arith.constant 1.000000e+00 : f32
      %76 = vector.broadcast %cst_28 : f32 to vector<8x384xf32>
      %77 = arith.addf %76, %75 : vector<8x384xf32>
      %78 = arith.divf %76, %77 : vector<8x384xf32>
      %79 = vector.extract_strided_slice %72 {offsets = [0, 384], sizes = [8, 128], strides = [1, 1]} : vector<8x512xf32> to vector<8x128xf32>
      %80 = math.tanh %79 : vector<8x128xf32>
      %81 = vector.extract_strided_slice %78 {offsets = [0, 0], sizes = [8, 128], strides = [1, 1]} : vector<8x384xf32> to vector<8x128xf32>
      %82 = vector.extract_strided_slice %78 {offsets = [0, 128], sizes = [8, 128], strides = [1, 1]} : vector<8x384xf32> to vector<8x128xf32>
      %83 = vector.extract_strided_slice %78 {offsets = [0, 256], sizes = [8, 128], strides = [1, 1]} : vector<8x384xf32> to vector<8x128xf32>
      %84 = arith.mulf %82, %65 : vector<8x128xf32>
      %85 = arith.mulf %81, %80 : vector<8x128xf32>
      %86 = arith.addf %84, %85 : vector<8x128xf32>
      %87 = math.tanh %86 : vector<8x128xf32>
      %88 = arith.mulf %83, %87 : vector<8x128xf32>
      %89 = arith.index_cast %10 : i32 to index
      %c3 = arith.constant 3 : index
      %c0_29 = arith.constant 0 : index
      %c0_30 = arith.constant 0 : index
      %90 = vector.load %arg9[%89, %c3, %c0_29, %c0_30] : memref<2x8x8x512xf32, #tpu.memory_space<vmem>>, vector<1x1x8x512xf32>
      %91 = vector.shape_cast %90 : vector<1x1x8x512xf32> to vector<8x512xf32>
      %cst_31 = arith.constant dense<0.000000e+00> : vector<8x512xf32>
      %92 = tpu.matmul %88, %23, %cst_31 {dimension_numbers = #tpu.dot_dimension_numbers<[1], [0], [0], [1], [0, 0, 1, 1], [], []>} : vector<8x128xf32>, vector<128x512xf32>, vector<8x512xf32> -> vector<8x512xf32>
      %93 = arith.addf %91, %92 : vector<8x512xf32>
      %94 = vector.extract_strided_slice %93 {offsets = [0, 0], sizes = [8, 384], strides = [1, 1]} : vector<8x512xf32> to vector<8x384xf32>
      %95 = arith.negf %94 : vector<8x384xf32>
      %96 = math.exp %95 : vector<8x384xf32>
      %cst_32 = arith.constant 1.000000e+00 : f32
      %97 = vector.broadcast %cst_32 : f32 to vector<8x384xf32>
      %98 = arith.addf %97, %96 : vector<8x384xf32>
      %99 = arith.divf %97, %98 : vector<8x384xf32>
      %100 = vector.extract_strided_slice %93 {offsets = [0, 384], sizes = [8, 128], strides = [1, 1]} : vector<8x512xf32> to vector<8x128xf32>
      %101 = math.tanh %100 : vector<8x128xf32>
      %102 = vector.extract_strided_slice %99 {offsets = [0, 0], sizes = [8, 128], strides = [1, 1]} : vector<8x384xf32> to vector<8x128xf32>
      %103 = vector.extract_strided_slice %99 {offsets = [0, 128], sizes = [8, 128], strides = [1, 1]} : vector<8x384xf32> to vector<8x128xf32>
      %104 = vector.extract_strided_slice %99 {offsets = [0, 256], sizes = [8, 128], strides = [1, 1]} : vector<8x384xf32> to vector<8x128xf32>
      %105 = arith.mulf %103, %86 : vector<8x128xf32>
      %106 = arith.mulf %102, %101 : vector<8x128xf32>
      %107 = arith.addf %105, %106 : vector<8x128xf32>
      %108 = math.tanh %107 : vector<8x128xf32>
      %109 = arith.mulf %104, %108 : vector<8x128xf32>
      %110 = arith.index_cast %10 : i32 to index
      %c4 = arith.constant 4 : index
      %c0_33 = arith.constant 0 : index
      %c0_34 = arith.constant 0 : index
      %111 = vector.load %arg9[%110, %c4, %c0_33, %c0_34] : memref<2x8x8x512xf32, #tpu.memory_space<vmem>>, vector<1x1x8x512xf32>
      %112 = vector.shape_cast %111 : vector<1x1x8x512xf32> to vector<8x512xf32>
      %cst_35 = arith.constant dense<0.000000e+00> : vector<8x512xf32>
      %113 = tpu.matmul %109, %23, %cst_35 {dimension_numbers = #tpu.dot_dimension_numbers<[1], [0], [0], [1], [0, 0, 1, 1], [], []>} : vector<8x128xf32>, vector<128x512xf32>, vector<8x512xf32> -> vector<8x512xf32>
      %114 = arith.addf %112, %113 : vector<8x512xf32>
      %115 = vector.extract_strided_slice %114 {offsets = [0, 0], sizes = [8, 384], strides = [1, 1]} : vector<8x512xf32> to vector<8x384xf32>
      %116 = arith.negf %115 : vector<8x384xf32>
      %117 = math.exp %116 : vector<8x384xf32>
      %cst_36 = arith.constant 1.000000e+00 : f32
      %118 = vector.broadcast %cst_36 : f32 to vector<8x384xf32>
      %119 = arith.addf %118, %117 : vector<8x384xf32>
      %120 = arith.divf %118, %119 : vector<8x384xf32>
      %121 = vector.extract_strided_slice %114 {offsets = [0, 384], sizes = [8, 128], strides = [1, 1]} : vector<8x512xf32> to vector<8x128xf32>
      %122 = math.tanh %121 : vector<8x128xf32>
      %123 = vector.extract_strided_slice %120 {offsets = [0, 0], sizes = [8, 128], strides = [1, 1]} : vector<8x384xf32> to vector<8x128xf32>
      %124 = vector.extract_strided_slice %120 {offsets = [0, 128], sizes = [8, 128], strides = [1, 1]} : vector<8x384xf32> to vector<8x128xf32>
      %125 = vector.extract_strided_slice %120 {offsets = [0, 256], sizes = [8, 128], strides = [1, 1]} : vector<8x384xf32> to vector<8x128xf32>
      %126 = arith.mulf %124, %107 : vector<8x128xf32>
      %127 = arith.mulf %123, %122 : vector<8x128xf32>
      %128 = arith.addf %126, %127 : vector<8x128xf32>
      %129 = math.tanh %128 : vector<8x128xf32>
      %130 = arith.mulf %125, %129 : vector<8x128xf32>
      %131 = arith.index_cast %10 : i32 to index
      %c5 = arith.constant 5 : index
      %c0_37 = arith.constant 0 : index
      %c0_38 = arith.constant 0 : index
      %132 = vector.load %arg9[%131, %c5, %c0_37, %c0_38] : memref<2x8x8x512xf32, #tpu.memory_space<vmem>>, vector<1x1x8x512xf32>
      %133 = vector.shape_cast %132 : vector<1x1x8x512xf32> to vector<8x512xf32>
      %cst_39 = arith.constant dense<0.000000e+00> : vector<8x512xf32>
      %134 = tpu.matmul %130, %23, %cst_39 {dimension_numbers = #tpu.dot_dimension_numbers<[1], [0], [0], [1], [0, 0, 1, 1], [], []>} : vector<8x128xf32>, vector<128x512xf32>, vector<8x512xf32> -> vector<8x512xf32>
      %135 = arith.addf %133, %134 : vector<8x512xf32>
      %136 = vector.extract_strided_slice %135 {offsets = [0, 0], sizes = [8, 384], strides = [1, 1]} : vector<8x512xf32> to vector<8x384xf32>
      %137 = arith.negf %136 : vector<8x384xf32>
      %138 = math.exp %137 : vector<8x384xf32>
      %cst_40 = arith.constant 1.000000e+00 : f32
      %139 = vector.broadcast %cst_40 : f32 to vector<8x384xf32>
      %140 = arith.addf %139, %138 : vector<8x384xf32>
      %141 = arith.divf %139, %140 : vector<8x384xf32>
      %142 = vector.extract_strided_slice %135 {offsets = [0, 384], sizes = [8, 128], strides = [1, 1]} : vector<8x512xf32> to vector<8x128xf32>
      %143 = math.tanh %142 : vector<8x128xf32>
      %144 = vector.extract_strided_slice %141 {offsets = [0, 0], sizes = [8, 128], strides = [1, 1]} : vector<8x384xf32> to vector<8x128xf32>
      %145 = vector.extract_strided_slice %141 {offsets = [0, 128], sizes = [8, 128], strides = [1, 1]} : vector<8x384xf32> to vector<8x128xf32>
      %146 = vector.extract_strided_slice %141 {offsets = [0, 256], sizes = [8, 128], strides = [1, 1]} : vector<8x384xf32> to vector<8x128xf32>
      %147 = arith.mulf %145, %128 : vector<8x128xf32>
      %148 = arith.mulf %144, %143 : vector<8x128xf32>
      %149 = arith.addf %147, %148 : vector<8x128xf32>
      %150 = math.tanh %149 : vector<8x128xf32>
      %151 = arith.mulf %146, %150 : vector<8x128xf32>
      %152 = arith.index_cast %10 : i32 to index
      %c6 = arith.constant 6 : index
      %c0_41 = arith.constant 0 : index
      %c0_42 = arith.constant 0 : index
      %153 = vector.load %arg9[%152, %c6, %c0_41, %c0_42] : memref<2x8x8x512xf32, #tpu.memory_space<vmem>>, vector<1x1x8x512xf32>
      %154 = vector.shape_cast %153 : vector<1x1x8x512xf32> to vector<8x512xf32>
      %cst_43 = arith.constant dense<0.000000e+00> : vector<8x512xf32>
      %155 = tpu.matmul %151, %23, %cst_43 {dimension_numbers = #tpu.dot_dimension_numbers<[1], [0], [0], [1], [0, 0, 1, 1], [], []>} : vector<8x128xf32>, vector<128x512xf32>, vector<8x512xf32> -> vector<8x512xf32>
      %156 = arith.addf %154, %155 : vector<8x512xf32>
      %157 = vector.extract_strided_slice %156 {offsets = [0, 0], sizes = [8, 384], strides = [1, 1]} : vector<8x512xf32> to vector<8x384xf32>
      %158 = arith.negf %157 : vector<8x384xf32>
      %159 = math.exp %158 : vector<8x384xf32>
      %cst_44 = arith.constant 1.000000e+00 : f32
      %160 = vector.broadcast %cst_44 : f32 to vector<8x384xf32>
      %161 = arith.addf %160, %159 : vector<8x384xf32>
      %162 = arith.divf %160, %161 : vector<8x384xf32>
      %163 = vector.extract_strided_slice %156 {offsets = [0, 384], sizes = [8, 128], strides = [1, 1]} : vector<8x512xf32> to vector<8x128xf32>
      %164 = math.tanh %163 : vector<8x128xf32>
      %165 = vector.extract_strided_slice %162 {offsets = [0, 0], sizes = [8, 128], strides = [1, 1]} : vector<8x384xf32> to vector<8x128xf32>
      %166 = vector.extract_strided_slice %162 {offsets = [0, 128], sizes = [8, 128], strides = [1, 1]} : vector<8x384xf32> to vector<8x128xf32>
      %167 = vector.extract_strided_slice %162 {offsets = [0, 256], sizes = [8, 128], strides = [1, 1]} : vector<8x384xf32> to vector<8x128xf32>
      %168 = arith.mulf %166, %149 : vector<8x128xf32>
      %169 = arith.mulf %165, %164 : vector<8x128xf32>
      %170 = arith.addf %168, %169 : vector<8x128xf32>
      %171 = math.tanh %170 : vector<8x128xf32>
      %172 = arith.mulf %167, %171 : vector<8x128xf32>
      %173 = arith.index_cast %10 : i32 to index
      %c7 = arith.constant 7 : index
      %c0_45 = arith.constant 0 : index
      %c0_46 = arith.constant 0 : index
      %174 = vector.load %arg9[%173, %c7, %c0_45, %c0_46] : memref<2x8x8x512xf32, #tpu.memory_space<vmem>>, vector<1x1x8x512xf32>
      %175 = vector.shape_cast %174 : vector<1x1x8x512xf32> to vector<8x512xf32>
      %cst_47 = arith.constant dense<0.000000e+00> : vector<8x512xf32>
      %176 = tpu.matmul %172, %23, %cst_47 {dimension_numbers = #tpu.dot_dimension_numbers<[1], [0], [0], [1], [0, 0, 1, 1], [], []>} : vector<8x128xf32>, vector<128x512xf32>, vector<8x512xf32> -> vector<8x512xf32>
      %177 = arith.addf %175, %176 : vector<8x512xf32>
      %178 = vector.extract_strided_slice %177 {offsets = [0, 0], sizes = [8, 384], strides = [1, 1]} : vector<8x512xf32> to vector<8x384xf32>
      %179 = arith.negf %178 : vector<8x384xf32>
      %180 = math.exp %179 : vector<8x384xf32>
      %cst_48 = arith.constant 1.000000e+00 : f32
      %181 = vector.broadcast %cst_48 : f32 to vector<8x384xf32>
      %182 = arith.addf %181, %180 : vector<8x384xf32>
      %183 = arith.divf %181, %182 : vector<8x384xf32>
      %184 = vector.extract_strided_slice %177 {offsets = [0, 384], sizes = [8, 128], strides = [1, 1]} : vector<8x512xf32> to vector<8x128xf32>
      %185 = math.tanh %184 : vector<8x128xf32>
      %186 = vector.extract_strided_slice %183 {offsets = [0, 0], sizes = [8, 128], strides = [1, 1]} : vector<8x384xf32> to vector<8x128xf32>
      %187 = vector.extract_strided_slice %183 {offsets = [0, 128], sizes = [8, 128], strides = [1, 1]} : vector<8x384xf32> to vector<8x128xf32>
      %188 = vector.extract_strided_slice %183 {offsets = [0, 256], sizes = [8, 128], strides = [1, 1]} : vector<8x384xf32> to vector<8x128xf32>
      %189 = arith.mulf %187, %170 : vector<8x128xf32>
      %190 = arith.mulf %186, %185 : vector<8x128xf32>
      %191 = arith.addf %189, %190 : vector<8x128xf32>
      %192 = math.tanh %191 : vector<8x128xf32>
      %193 = arith.mulf %188, %192 : vector<8x128xf32>
      %c0_49 = arith.constant 0 : index
      %c0_50 = arith.constant 0 : index
      %194 = vector.load %arg10[%c0_49, %c0_50] : memref<8x128xf32, #tpu.memory_space<vmem>>, vector<8x128xf32>
      tpu.vector_store %arg10[%c0_49, %c0_50], %193 {strides = array<i32>} : memref<8x128xf32, #tpu.memory_space<vmem>>, vector<8x128xf32>,
      %c0_51 = arith.constant 0 : index
      %c0_52 = arith.constant 0 : index
      %195 = vector.load %arg11[%c0_51, %c0_52] : memref<8x128xf32, #tpu.memory_space<vmem>>, vector<8x128xf32>
      tpu.vector_store %arg11[%c0_51, %c0_52], %191 {strides = array<i32>} : memref<8x128xf32, #tpu.memory_space<vmem>>, vector<8x128xf32>,
    } else {
    }
    %c2_i32_10 = arith.constant 2 : i32
    %20 = arith.cmpi eq, %arg1, %c2_i32_10 : i32
    %21 = arith.extui %20 : i1 to i32
    %c0_i32_11 = arith.constant 0 : i32
    %22 = arith.cmpi ne, %21, %c0_i32_11 : i32
    scf.if %22 {
      %c0 = arith.constant 0 : index
      %c0_12 = arith.constant 0 : index
      %23 = vector.load %arg10[%c0, %c0_12] : memref<8x128xf32, #tpu.memory_space<vmem>>, vector<8x128xf32>
      %c0_13 = arith.constant 0 : index
      %c0_14 = arith.constant 0 : index
      %24 = vector.load %arg6[%c0_13, %c0_14] : memref<128x128xf32, #tpu.memory_space<vmem>>, vector<128x128xf32>
      %cst = arith.constant dense<0.000000e+00> : vector<8x128xf32>
      %25 = tpu.matmul %23, %24, %cst {dimension_numbers = #tpu.dot_dimension_numbers<[1], [0], [0], [1], [0, 0, 1, 1], [], []>} : vector<8x128xf32>, vector<128x128xf32>, vector<8x128xf32> -> vector<8x128xf32>
      %c0_15 = arith.constant 0 : index
      %c0_16 = arith.constant 0 : index
      %26 = vector.load %arg7[%c0_15, %c0_16] : memref<1x128xf32, #tpu.memory_space<vmem>>, vector<1x128xf32>
      %27 = vector.broadcast %26 : vector<1x128xf32> to vector<8x128xf32>
      %28 = arith.addf %25, %27 : vector<8x128xf32>
      %c0_17 = arith.constant 0 : index
      %c0_18 = arith.constant 0 : index
      %29 = vector.load %arg8[%c0_17, %c0_18] : memref<8x128xf32, #tpu.memory_space<vmem>>, vector<8x128xf32>
      tpu.vector_store %arg8[%c0_17, %c0_18], %28 {strides = array<i32>} : memref<8x128xf32, #tpu.memory_space<vmem>>, vector<8x128xf32>,
    } else {
    }
    return
  }
  func.func @transform_0(%arg0: i32, %arg1: i32) -> (i32, i32, i32) {
    %c0_i32 = arith.constant 0 : i32
    %c0_i32_0 = arith.constant 0 : i32
    return %arg1, %arg0, %c0_i32 : i32, i32, i32
  }
  func.func @transform_1(%arg0: i32, %arg1: i32) -> (i32, i32) {
    %c0_i32 = arith.constant 0 : i32
    %c0_i32_0 = arith.constant 0 : i32
    %c0_i32_1 = arith.constant 0 : i32
    return %c0_i32, %c0_i32_0 : i32, i32
  }
  func.func @transform_2(%arg0: i32, %arg1: i32) -> (i32, i32) {
    %c0_i32 = arith.constant 0 : i32
    %c0_i32_0 = arith.constant 0 : i32
    %c0_i32_1 = arith.constant 0 : i32
    return %c0_i32, %c0_i32_0 : i32, i32
  }
  func.func @transform_3(%arg0: i32, %arg1: i32) -> (i32, i32) {
    %c0_i32 = arith.constant 0 : i32
    %c0_i32_0 = arith.constant 0 : i32
    %c0_i32_1 = arith.constant 0 : i32
    return %c0_i32, %c0_i32_0 : i32, i32
  }
  func.func @transform_4(%arg0: i32, %arg1: i32) -> (i32, i32) {
    %c0_i32 = arith.constant 0 : i32
    %c0_i32_0 = arith.constant 0 : i32
    %c0_i32_1 = arith.constant 0 : i32
    return %c0_i32, %c0_i32_0 : i32, i32
  }
  func.func @transform_5(%arg0: i32, %arg1: i32) -> (i32, i32) {
    %c0_i32 = arith.constant 0 : i32
    %c0_i32_0 = arith.constant 0 : i32
    %c0_i32_1 = arith.constant 0 : i32
    return %c0_i32, %c0_i32_0 : i32, i32
  }
  func.func @transform_6(%arg0: i32, %arg1: i32) -> (i32, i32) {
    %c0_i32 = arith.constant 0 : i32
    %c0_i32_0 = arith.constant 0 : i32
    return %arg0, %c0_i32 : i32, i32
  }
}

</mosaic_0001>

<llo_original>
// kernel: tpu_custom_call.1
$region0: #{tpu_custom_call.1}
  #allocation0 [shape = 'u32[]', space=smem, size = 0x4, offset = 0x4, fixed_abs, tag = 'smem constant byte address 0x4 - core index']
  #allocation1 [shape = 'u32[144,128]{1,0:T(1,128)}', space=vmem, size = 0x12000, scoped, tag = 'internal scratch']
  #allocation2 [shape = 'f32[2,8,8,512]{3,2,1,0:T(8,128)}', space=vmem, size = 0x40000, scoped, tag = 'scratch operand']
  #allocation3 [shape = 'f32[8,128]{1,0:T(8,128)}', space=vmem, size = 0x1000, scoped, tag = 'scratch operand']
  #allocation4 [shape = 'f32[8,128]{1,0:T(8,128)}', space=vmem, size = 0x1000, scoped, tag = 'scratch operand']
  %s0 = inlined_call_operand.vmem [shape: f32[24,8,16], index: 0, kind: input, shape index: {}]
  %s1 = inlined_call_operand.vmem [shape: f32[16,512], index: 1, kind: input, shape index: {}]
  %s2 = inlined_call_operand.hbm [shape: f32[128,512], index: 2, kind: input, shape index: {}]
  %s3 = inlined_call_operand.vmem [shape: f32[1,512], index: 3, kind: input, shape index: {}]
  %s4 = inlined_call_operand.vmem [shape: f32[128,128], index: 4, kind: input, shape index: {}]
  %s5 = inlined_call_operand.vmem [shape: f32[1,128], index: 5, kind: input, shape index: {}]
  %s6 = inlined_call_operand.hbm [shape: f32[8,128], index: 6, kind: output, shape index: {}]
  %s7 = sld [smem:[#allocation0]]
  $region77: #{tpu_custom_call.1} parent=0
    _
  %s9 = ssub.s32 1, %s7
  %s10 = scalar_select 0, %s9, %s7
  $region1: #{tpu_custom_call.1} parent=0
    #allocation5 [shape = 'u8[262144]{0}', space=vmem, size = 0x40000, scoped, tag = 'input window, operand 2, single buffered']
    #allocation6 [shape = 's32[2]{0}', space=sflag, size = 0x8, scoped, tag = 'scoped memory for tpu_custom_call.1']
    #allocation7 [shape = 's32[2]{0}', space=sflag, size = 0x8, scoped, tag = 'scoped memory for tpu_custom_call.1']
    #allocation8 [shape = 'u8[4096]{0}', space=vmem, size = 0x1000, scoped, tag = 'output window, operand 0, single buffered']
    %11 = vsyncpa [#allocation6], 0
    %12 = vsyncpa [#allocation7], 0
    loop: start=0, step=1, limit=5
    $region2: #{tpu_custom_call.1} parent=1 // loop_pre_header
      _
    $region3: #{tpu_custom_call.1} parent=1 // loop_header
      %s14 = sphi 0, %s18
      %p15 = scmp.ge.s32.totalorder %s14, 5
      %s21 = sphi 0, %s33
      %s22 = sphi 0, %s29
      %s23 = sphi 0, %s21
      %s24 = sphi 0, %s22
      %s25 = sphi 0, %s23
      %s26 = sphi 0, %s24
      %s38 = sphi 0, %s40
      %s41 = sphi 0, %s38
      %s42 = sphi 0, %s41
      %s58 = sphi 0, %s42
      %s62 = sphi 0, %s62
      %s64 = sphi 0, %s62
      %s65 = sphi 0, %s64
      %s79 = sphi 0, %s65
      %s83 = sphi 0, %s83
      %s85 = sphi 0, %s83
      %s86 = sphi 0, %s85
      %s100 = sphi 0, %s86
      %s104 = sphi 0, %s104
      %s106 = sphi 0, %s104
      %s107 = sphi 0, %s106
      %s121 = sphi 0, %s107
      %s125 = sphi 0, %s125
      %s127 = sphi 0, %s125
      %s128 = sphi 0, %s127
      %s142 = sphi 0, %s128
      %s146 = sphi 0, %s146
      %s148 = sphi 0, %s146
      %s149 = sphi 0, %s148
      %s163 = sphi 0, %s149
      %s169 = sphi 0, %s171
      %s172 = sphi 0, %s169
      %s173 = sphi 0, %s172
      %s189 = sphi 0, %s173
    $region4: #{tpu_custom_call.1} parent=1 // loop_header_branch
      %17 = sbr.rel (%p15) target = $region8
    $region5: #{tpu_custom_call.1} parent=1 // loop_body
      %s19 = ssub.s32 %s14, 1
      %s20 = ssub.s32 %s14, 2
      %s27 = sadd.s32 1, %s22
      %p28 = scmp.ge.s32.totalorder %s27, 3
      %s29 = scalar_select %p28, 0, %s27
      %s30 = sadd.s32 1, %s21
      %s31 = scalar_select %p28, %s30, %s21
      %p32 = scmp.ge.s32.totalorder %s31, 1
      %s33 = scalar_select %p32, 0, %s31
      %s34 = ssub.s32 %s22, %s29
      %s35 = ssub.s32 %s21, %s33
      %s36 = sor.u32 %s34, %s35
      %p37 = scmp.eq.s32.totalorder %s36, 0
      %s39 = sadd.s32 %s38, 1
      %s40 = scalar_select %p37, %s38, %s39
      %p43 = pneg %p37
      %p44 = scmp.eq.s32.totalorder %s14, 2
      %p45 = por %p43, %p44
      %p46 = scmp.ne.s32.totalorder %s38, %s41
      %p47 = scmp.eq.s32.totalorder %s14, 0
      %p48 = por %p46, %p47
      %p49 = scmp.ne.s32.totalorder %s38, %s41
      %p50 = scmp.eq.s32.totalorder %s19, 2
      %p51 = por %p49, %p50
      %p52 = scmp.ne.s32.totalorder %s41, %s42
      %p53 = scmp.eq.s32.totalorder %s19, 0
      %p54 = por %p52, %p53
      %p55 = scmp.ne.s32.totalorder %s41, %s42
      %p56 = scmp.eq.s32.totalorder %s20, 2
      %p57 = por %p55, %p56
      %p59 = scmp.ne.s32.totalorder %s42, %s58
      %p60 = scmp.eq.s32.totalorder %s20, 0
      %p61 = por %p59, %p60
      %s63 = sadd.s32 %s62, 1
      %p66 = scmp.eq.s32.totalorder %s14, 2
      %p67 = scmp.ne.s32.totalorder %s62, %s64
      %p68 = scmp.eq.s32.totalorder %s14, 0
      %p69 = por %p67, %p68
      %p70 = scmp.ne.s32.totalorder %s62, %s64
      %p71 = scmp.eq.s32.totalorder %s19, 2
      %p72 = por %p70, %p71
      %p73 = scmp.ne.s32.totalorder %s64, %s65
      %p74 = scmp.eq.s32.totalorder %s19, 0
      %p75 = por %p73, %p74
      %p76 = scmp.ne.s32.totalorder %s64, %s65
      %p77 = scmp.eq.s32.totalorder %s20, 2
      %p78 = por %p76, %p77
      %p80 = scmp.ne.s32.totalorder %s65, %s79
      %p81 = scmp.eq.s32.totalorder %s20, 0
      %p82 = por %p80, %p81
      %s84 = sadd.s32 %s83, 1
      %p87 = scmp.eq.s32.totalorder %s14, 2
      %p88 = scmp.ne.s32.totalorder %s83, %s85
      %p89 = scmp.eq.s32.totalorder %s14, 0
      %p90 = por %p88, %p89
      %p91 = scmp.ne.s32.totalorder %s83, %s85
      %p92 = scmp.eq.s32.totalorder %s19, 2
      %p93 = por %p91, %p92
      %p94 = scmp.ne.s32.totalorder %s85, %s86
      %p95 = scmp.eq.s32.totalorder %s19, 0
      %p96 = por %p94, %p95
      %p97 = scmp.ne.s32.totalorder %s85, %s86
      %p98 = scmp.eq.s32.totalorder %s20, 2
      %p99 = por %p97, %p98
      %p101 = scmp.ne.s32.totalorder %s86, %s100
      %p102 = scmp.eq.s32.totalorder %s20, 0
      %p103 = por %p101, %p102
      %s105 = sadd.s32 %s104, 1
      %p108 = scmp.eq.s32.totalorder %s14, 2
      %p109 = scmp.ne.s32.totalorder %s104, %s106
      %p110 = scmp.eq.s32.totalorder %s14, 0
      %p111 = por %p109, %p110
      %p112 = scmp.ne.s32.totalorder %s104, %s106
      %p113 = scmp.eq.s32.totalorder %s19, 2
      %p114 = por %p112, %p113
      %p115 = scmp.ne.s32.totalorder %s106, %s107
      %p116 = scmp.eq.s32.totalorder %s19, 0
      %p117 = por %p115, %p116
      %p118 = scmp.ne.s32.totalorder %s106, %s107
      %p119 = scmp.eq.s32.totalorder %s20, 2
      %p120 = por %p118, %p119
      %p122 = scmp.ne.s32.totalorder %s107, %s121
      %p123 = scmp.eq.s32.totalorder %s20, 0
      %p124 = por %p122, %p123
      %s126 = sadd.s32 %s125, 1
      %p129 = scmp.eq.s32.totalorder %s14, 2
      %p130 = scmp.ne.s32.totalorder %s125, %s127
      %p131 = scmp.eq.s32.totalorder %s14, 0
      %p132 = por %p130, %p131
      %p133 = scmp.ne.s32.totalorder %s125, %s127
      %p134 = scmp.eq.s32.totalorder %s19, 2
      %p135 = por %p133, %p134
      %p136 = scmp.ne.s32.totalorder %s127, %s128
      %p137 = scmp.eq.s32.totalorder %s19, 0
      %p138 = por %p136, %p137
      %p139 = scmp.ne.s32.totalorder %s127, %s128
      %p140 = scmp.eq.s32.totalorder %s20, 2
      %p141 = por %p139, %p140
      %p143 = scmp.ne.s32.totalorder %s128, %s142
      %p144 = scmp.eq.s32.totalorder %s20, 0
      %p145 = por %p143, %p144
      %s147 = sadd.s32 %s146, 1
      %p150 = scmp.eq.s32.totalorder %s14, 2
      %p151 = scmp.ne.s32.totalorder %s146, %s148
      %p152 = scmp.eq.s32.totalorder %s14, 0
      %p153 = por %p151, %p152
      %p154 = scmp.ne.s32.totalorder %s146, %s148
      %p155 = scmp.eq.s32.totalorder %s19, 2
      %p156 = por %p154, %p155
      %p157 = scmp.ne.s32.totalorder %s148, %s149
      %p158 = scmp.eq.s32.totalorder %s19, 0
      %p159 = por %p157, %p158
      %p160 = scmp.ne.s32.totalorder %s148, %s149
      %p161 = scmp.eq.s32.totalorder %s20, 2
      %p162 = por %p160, %p161
      %p164 = scmp.ne.s32.totalorder %s149, %s163
      %p165 = scmp.eq.s32.totalorder %s20, 0
      %p166 = por %p164, %p165
      %s167 = ssub.s32 %s21, %s33
      %p168 = scmp.eq.s32.totalorder %s167, 0
      %s170 = sadd.s32 %s169, 1
      %s171 = scalar_select %p168, %s169, %s170
      %p174 = pneg %p168
      %p175 = scmp.eq.s32.totalorder %s14, 2
      %p176 = por %p174, %p175
      %p177 = scmp.ne.s32.totalorder %s169, %s172
      %p178 = scmp.eq.s32.totalorder %s14, 0
      %p179 = por %p177, %p178
      %p180 = scmp.ne.s32.totalorder %s169, %s172
      %p181 = scmp.eq.s32.totalorder %s19, 2
      %p182 = por %p180, %p181
      %p183 = scmp.ne.s32.totalorder %s172, %s173
      %p184 = scmp.eq.s32.totalorder %s19, 0
      %p185 = por %p183, %p184
      %p186 = scmp.ne.s32.totalorder %s172, %s173
      %p187 = scmp.eq.s32.totalorder %s20, 2
      %p188 = por %p186, %p187
      %p190 = scmp.ne.s32.totalorder %s173, %s189
      %p191 = scmp.eq.s32.totalorder %s20, 0
      %p192 = por %p190, %p191
      %p193 = scmp.le.s32.totalorder 1, %s14
      %p194 = scmp.lt.s32.totalorder %s14, 4
      %p195 = pnand %p193, %p194
      %p196 = pneg %p195
      // Predicated region
      $region9: #{tpu_custom_call.1} parent=5 // pred_check
        _
      $region10: #{tpu_custom_call.1} parent=5 // pred_check_branch
        %198 = sbr.rel (%p195) target = $region12
      $region11: #{tpu_custom_call.1} parent=5 // pred_region
        %s199 = ssub.s32 %s14, 1
        // Predicated region
        $region13: #{tpu_custom_call.1} parent=11 // pred_check
          %p200 = pneg %p75
        $region14: #{tpu_custom_call.1} parent=11 // pred_check_branch
          %202 = sbr.rel (%p200) target = $region16
        $region15: #{tpu_custom_call.1} parent=11 // pred_region
          _
        $region16: #{tpu_custom_call.1} parent=11 // pred_fallthru
          _
        // Predicated region
        $region17: #{tpu_custom_call.1} parent=11 // pred_check
          %p203 = pneg %p96
        $region18: #{tpu_custom_call.1} parent=11 // pred_check_branch
          %205 = sbr.rel (%p203) target = $region20
        $region19: #{tpu_custom_call.1} parent=11 // pred_region
          %s207 = ssub.s32 8192, 8192
          %208 = vsyncadd [#allocation6], %s207
          %s209 = sshll.u32 [#allocation5], 4
          %s210 = int_to_ptr.vmem [resolvable:$true] %s209
          %215 = dma.hbm_to_vmem [thread:$0]  %s2, 8192, %s210, [#allocation6], 512, 512, 32
        $region20: #{tpu_custom_call.1} parent=11 // pred_fallthru
          _
        // Predicated region
        $region21: #{tpu_custom_call.1} parent=11 // pred_check
          %p216 = pneg %p117
        $region22: #{tpu_custom_call.1} parent=11 // pred_check_branch
          %218 = sbr.rel (%p216) target = $region24
        $region23: #{tpu_custom_call.1} parent=11 // pred_region
          _
        $region24: #{tpu_custom_call.1} parent=11 // pred_fallthru
          _
        // Predicated region
        $region25: #{tpu_custom_call.1} parent=11 // pred_check
          %p219 = pneg %p138
        $region26: #{tpu_custom_call.1} parent=11 // pred_check_branch
          %221 = sbr.rel (%p219) target = $region28
        $region27: #{tpu_custom_call.1} parent=11 // pred_region
          _
        $region28: #{tpu_custom_call.1} parent=11 // pred_fallthru
          _
        // Predicated region
        $region29: #{tpu_custom_call.1} parent=11 // pred_check
          %p222 = pneg %p159
        $region30: #{tpu_custom_call.1} parent=11 // pred_check_branch
          %224 = sbr.rel (%p222) target = $region32
        $region31: #{tpu_custom_call.1} parent=11 // pred_region
          _
        $region32: #{tpu_custom_call.1} parent=11 // pred_fallthru
          _
      $region12: #{tpu_custom_call.1} parent=5 // pred_fallthru
        _
      %p225 = scmp.lt.s32.totalorder %s14, 3
      // Predicated region
      $region33: #{tpu_custom_call.1} parent=5 // pred_check
        %p226 = pneg %p225
      $region34: #{tpu_custom_call.1} parent=5 // pred_check_branch
        %228 = sbr.rel (%p226) target = $region36
      $region35: #{tpu_custom_call.1} parent=5 // pred_region
        // Predicated region
        $region37: #{tpu_custom_call.1} parent=35 // pred_check
          %p229 = pneg %p48
        $region38: #{tpu_custom_call.1} parent=35 // pred_check_branch
          %231 = sbr.rel (%p229) target = $region40
        $region39: #{tpu_custom_call.1} parent=35 // pred_region
          %s232 = smul.u32 8, %s22
          %p233 = scmp.lt.s32.totalorder %s232, 23
          %s234 = scalar_select %p233, %s232, 23
          %p235 = scmp.lt.s32.totalorder %s21, 0
          %s236 = scalar_select %p235, %s21, 0
          %s237 = sadd.s32 %s236, %s234
          %s238 = smul.addr %s237, 8
          %s239 = scalar_lea.vmem %s0, %s238
          %s240 = smul.u32 8, %s22
        $region40: #{tpu_custom_call.1} parent=35 // pred_fallthru
          _
      $region36: #{tpu_custom_call.1} parent=5 // pred_fallthru
        _
      %p241 = scmp.le.s32.totalorder 1, %s14
      %p242 = scmp.lt.s32.totalorder %s14, 4
      %p243 = pnand %p241, %p242
      %p244 = pneg %p243
      // Predicated region
      $region41: #{tpu_custom_call.1} parent=5 // pred_check
        _
      $region42: #{tpu_custom_call.1} parent=5 // pred_check_branch
        %246 = sbr.rel (%p243) target = $region44
      $region43: #{tpu_custom_call.1} parent=5 // pred_region
        %s247 = ssub.s32 %s14, 1
        // Predicated region
        $region45: #{tpu_custom_call.1} parent=43 // pred_check
          %p248 = pneg %p96
        $region46: #{tpu_custom_call.1} parent=43 // pred_check_branch
          %250 = sbr.rel (%p248) target = $region48
        $region47: #{tpu_custom_call.1} parent=43 // pred_region
          %251 = dma.done [#allocation6], 8192
        $region48: #{tpu_custom_call.1} parent=43 // pred_fallthru
          _
        %s252 = smul.u32 8, %s24
        %p253 = scmp.lt.s32.totalorder %s252, 23
        %s254 = scalar_select %p253, %s252, 23
        %p255 = scmp.lt.s32.totalorder %s23, 0
        %s256 = scalar_select %p255, %s23, 0
        %s257 = sadd.s32 %s256, %s254
        %s258 = smul.addr %s257, 8
        %s259 = scalar_lea.vmem %s0, %s258
        %p260 = pneg %p54
        %p261 = pneg %p51
        %p262 = pneg %p75
        %p263 = pneg %p72
        %p264 = pneg %p96
        %p265 = pneg %p93
        %p266 = pneg %p117
        %p267 = pneg %p114
        %p268 = pneg %p138
        %p269 = pneg %p135
        %p270 = pneg %p159
        %p271 = pneg %p156
        %p272 = pneg %p185
        %p273 = pneg %p182
        %s274 = smul.u32 8, %s24
        %p275 = scmp.lt.s32.totalorder %s274, 23
        %s276 = scalar_select %p275, %s274, 23
        %p277 = scmp.lt.s32.totalorder %s23, 0
        %s278 = scalar_select %p277, %s23, 0
        %s279 = sadd.s32 %s278, %s276
        %s280 = smul.addr %s279, 8
        %s281 = scalar_lea.vmem %s0, %s280
        %s282 = smul.u32 8, %s24
        %p283 = scmp.lt.s32.totalorder %s24, 0
        %s284 = ssub.s32 0, %s24
        %s285 = scalar_select %p283, %s284, %s24
        %s286 = sand.u32 %s285, 1
        %s287 = ssub.s32 0, %s286
        %s288 = scalar_select %p283, %s287, %s286
        %p289 = scmp.ne.s32.totalorder %s288, 0
        %p290 = scmp.lt.s32.totalorder %s288, 0
        %p291 = pnand %p290, %p289
        %p292 = pneg %p291
        %s293 = sadd.s32 %s288, 2
        %s294 = scalar_select %p292, %s293, %s288
        %s295 = ssub.s32 1, %s294
        %p296 = scmp.eq.s32.totalorder %s24, 0
        // Predicated region
        $region49: #{tpu_custom_call.1} parent=43 // pred_check
          %p297 = pneg %p296
        $region50: #{tpu_custom_call.1} parent=43 // pred_check_branch
          %299 = sbr.rel (%p297) target = $region52
        $region51: #{tpu_custom_call.1} parent=43 // pred_region
          %300 = vst [vmem:[#allocation3] sm:$0xff] 0.0
          %301 = vst [vmem:[#allocation4] sm:$0xff] 0.0
        $region52: #{tpu_custom_call.1} parent=43 // pred_fallthru
          _
        %p302 = scmp.lt.s32.totalorder %s24, 2
        // Predicated region
        $region53: #{tpu_custom_call.1} parent=43 // pred_check
          %p303 = pneg %p302
        $region54: #{tpu_custom_call.1} parent=43 // pred_check_branch
          %305 = sbr.rel (%p303) target = $region56
        $region55: #{tpu_custom_call.1} parent=43 // pred_region
          %v306 = vld [vmem:[%s281] sm:$0xff]
          %v307 = vld [vmem:[%s281 + $0x8] sm:$0xff]
          %v308 = vld [vmem:[%s281 + $0x10] sm:$0xff]
          %v309 = vld [vmem:[%s281 + $0x18] sm:$0xff]
          %v310 = vld [vmem:[%s281 + $0x20] sm:$0xff]
          %v311 = vld [vmem:[%s281 + $0x28] sm:$0xff]
          %v312 = vld [vmem:[%s281 + $0x30] sm:$0xff]
          %v313 = vld [vmem:[%s281 + $0x38] sm:$0xff]
          %v314 = vld [vmem:[%s1] sm:$0xff]
          %v315 = vld [vmem:[%s1 + $0x8] sm:$0xff]
          %v316 = vld [vmem:[%s1 + $0x10] sm:$0xff]
          %v317 = vld [vmem:[%s1 + $0x18] sm:$0xff]
          %v318 = vld [vmem:[%s1 + $0x20] sm:$0xff]
          %v319 = vld [vmem:[%s1 + $0x28] sm:$0xff]
          %v320 = vld [vmem:[%s1 + $0x30] sm:$0xff]
          %v321 = vld [vmem:[%s1 + $0x38] sm:$0xff]
          %v322 = vld [vmem:[%s3] sm:$0xf]
          %v324 = vlaneseq
          %v325 = vshrl.u32 %v324, 7
          %v326 = vsub.s32 0, %v325
          %v327 = vrot.slane %v322, %v326
          %v328 = vlaneseq
          %v329 = vshrl.u32 %v328, 7
          %v330 = vsub.s32 1, %v329
          %v331 = vrot.slane %v322, %v330
          %v332 = vlaneseq
          %v333 = vshrl.u32 %v332, 7
          %v334 = vsub.s32 2, %v333
          %v335 = vrot.slane %v322, %v334
          %v336 = vlaneseq
          %v337 = vshrl.u32 %v336, 7
          %v338 = vsub.s32 3, %v337
          %v339 = vrot.slane %v322, %v338
          %vm344 = vcmask 130048
          %v346 = vsel %vm344, %v306, 0
          %v349 = vsel %vm344, %v307, 0
          %v352 = vsel %vm344, %v308, 0
          %v355 = vsel %vm344, %v309, 0
          %v358 = vsel %vm344, %v310, 0
          %v361 = vsel %vm344, %v311, 0
          %v364 = vsel %vm344, %v312, 0
          %v367 = vsel %vm344, %v313, 0
          %369 = vmatprep.subr.mxu0 %v315
          %370 = vmatpush1.msra.mxu0 %v314
          %371 = vmatprep.subr.mxu0 %v319
          %372 = vmatpush1.msra.mxu0 %v318
          %373 = vmatprep.subr.mxu0 0.0
          %374 = vmatpush1.msra.mxu0 0.0
          %375 = vmatprep.subr.mxu0 0.0
          %376 = vmatpush1.msra.mxu0 0.0
          %377 = vmatprep.subr.mxu0 0.0
          %378 = vmatpush1.msra.mxu0 0.0
          %379 = vmatprep.subr.mxu0 0.0
          %380 = vmatpush1.msra.mxu0 0.0
          %381 = vmatprep.subr.mxu0 0.0
          %382 = vmatpush1.msra.mxu0 0.0
          %383 = vmatprep.subr.mxu0 0.0
          %384 = vmatpush1.msra.mxu0 0.0
          %385 = vmatprep.subr.mxu0 0.0
          %386 = vmatpush1.msra.mxu0 0.0
          %387 = vmatprep.subr.mxu0 0.0
          %388 = vmatpush1.msra.mxu0 0.0
          %389 = vmatprep.subr.mxu0 0.0
          %390 = vmatpush1.msra.mxu0 0.0
          %391 = vmatprep.subr.mxu0 0.0
          %392 = vmatpush1.msra.mxu0 0.0
          %393 = vmatprep.subr.mxu0 0.0
          %394 = vmatpush1.msra.mxu0 0.0
          %395 = vmatprep.subr.mxu0 0.0
          %396 = vmatpush1.msra.mxu0 0.0
          %397 = vmatprep.subr.mxu0 0.0
          %398 = vmatpush1.msra.mxu0 0.0
          %399 = vmatprep.subr.mxu0 0.0
          %400 = vmatpush1.msra.mxu0 0.0
          %401 = vmatprep.subr.mxu0 0.0
          %402 = vmatpush1.msra.mxu0 0.0
          %403 = vmatprep.subr.mxu0 0.0
          %404 = vmatpush1.msra.mxu0 0.0
          %405 = vmatprep.subr.mxu0 0.0
          %406 = vmatpush1.msra.mxu0 0.0
          %407 = vmatprep.subr.mxu0 0.0
          %408 = vmatpush1.msra.mxu0 0.0
          %409 = vmatprep.subr.mxu0 0.0
          %410 = vmatpush1.msra.mxu0 0.0
          %411 = vmatprep.subr.mxu0 0.0
          %412 = vmatpush1.msra.mxu0 0.0
          %413 = vmatprep.subr.mxu0 0.0
          %414 = vmatpush1.msra.mxu0 0.0
          %415 = vmatprep.subr.mxu0 0.0
          %416 = vmatpush1.msra.mxu0 0.0
          %417 = vmatprep.subr.mxu0 0.0
          %418 = vmatpush1.msra.mxu0 0.0
          %419 = vmatprep.subr.mxu0 0.0
          %420 = vmatpush1.msra.mxu0 0.0
          %421 = vmatprep.subr.mxu0 0.0
          %422 = vmatpush1.msra.mxu0 0.0
          %423 = vmatprep.subr.mxu0 0.0
          %424 = vmatpush1.msra.mxu0 0.0
          %425 = vmatprep.subr.mxu0 0.0
          %426 = vmatpush1.msra.mxu0 0.0
          %427 = vmatprep.subr.mxu0 0.0
          %428 = vmatpush1.msra.mxu0 0.0
          %429 = vmatprep.subr.mxu0 0.0
          %430 = vmatpush1.msra.mxu0 0.0
          %431 = vmatprep.subr.mxu0 0.0
          %432 = vmatpush1.msra.mxu0 0.0
          %433 = vmatprep.mubr.f32.mxu0 0.0
          %434 = vmatmul.mubr.f32.gmra.mrb[0].mxu0 %v346
          %v435 = vpop.f32.mrb[0].mxu0
          %v436 = vadd.f32 %v327, %v435
          %v437 = vpop.f32.mrb[0].mxu0
          %v438 = vadd.f32 %v331, %v437
          %439 = vmatprep.mubr.f32.mxu0 0.0
          %440 = vmatmul.mubr.f32.gmra.mrb[0].mxu0 %v349
          %v441 = vpop.f32.mrb[0].mxu0
          %v442 = vadd.f32 %v327, %v441
          %v443 = vpop.f32.mrb[0].mxu0
          %v444 = vadd.f32 %v331, %v443
          %445 = vmatprep.mubr.f32.mxu0 0.0
          %446 = vmatmul.mubr.f32.gmra.mrb[0].mxu0 %v352
          %v447 = vpop.f32.mrb[0].mxu0
          %v448 = vadd.f32 %v327, %v447
          %v449 = vpop.f32.mrb[0].mxu0
          %v450 = vadd.f32 %v331, %v449
          %451 = vmatprep.mubr.f32.mxu0 0.0
          %452 = vmatmul.mubr.f32.gmra.mrb[0].mxu0 %v355
          %v453 = vpop.f32.mrb[0].mxu0
          %v454 = vadd.f32 %v327, %v453
          %v455 = vpop.f32.mrb[0].mxu0
          %v456 = vadd.f32 %v331, %v455
          %457 = vmatprep.mubr.f32.mxu0 0.0
          %458 = vmatmul.mubr.f32.gmra.mrb[0].mxu0 %v358
          %v459 = vpop.f32.mrb[0].mxu0
          %v460 = vadd.f32 %v327, %v459
          %v461 = vpop.f32.mrb[0].mxu0
          %v462 = vadd.f32 %v331, %v461
          %463 = vmatprep.mubr.f32.mxu0 0.0
          %464 = vmatmul.mubr.f32.gmra.mrb[0].mxu0 %v361
          %v465 = vpop.f32.mrb[0].mxu0
          %v466 = vadd.f32 %v327, %v465
          %v467 = vpop.f32.mrb[0].mxu0
          %v468 = vadd.f32 %v331, %v467
          %469 = vmatprep.mubr.f32.mxu0 0.0
          %470 = vmatmul.mubr.f32.gmra.mrb[0].mxu0 %v364
          %v471 = vpop.f32.mrb[0].mxu0
          %v472 = vadd.f32 %v327, %v471
          %v473 = vpop.f32.mrb[0].mxu0
          %v474 = vadd.f32 %v331, %v473
          %475 = vmatprep.mubr.f32.mxu0 0.0
          %476 = vmatmul.mubr.f32.gmra.mrb[0].mxu0 %v367
          %v477 = vpop.f32.mrb[0].mxu0
          %v478 = vadd.f32 %v327, %v477
          %v479 = vpop.f32.mrb[0].mxu0
          %v480 = vadd.f32 %v331, %v479
          %481 = vdwg.mxu0
          %482 = vmatprep.subr.mxu0 %v317
          %483 = vmatpush1.msra.mxu0 %v316
          %484 = vmatprep.subr.mxu0 %v321
          %485 = vmatpush1.msra.mxu0 %v320
          %486 = vmatprep.subr.mxu0 0.0
          %487 = vmatpush1.msra.mxu0 0.0
          %488 = vmatprep.subr.mxu0 0.0
          %489 = vmatpush1.msra.mxu0 0.0
          %490 = vmatprep.subr.mxu0 0.0
          %491 = vmatpush1.msra.mxu0 0.0
          %492 = vmatprep.subr.mxu0 0.0
          %493 = vmatpush1.msra.mxu0 0.0
          %494 = vmatprep.subr.mxu0 0.0
          %495 = vmatpush1.msra.mxu0 0.0
          %496 = vmatprep.subr.mxu0 0.0
          %497 = vmatpush1.msra.mxu0 0.0
          %498 = vmatprep.subr.mxu0 0.0
          %499 = vmatpush1.msra.mxu0 0.0
          %500 = vmatprep.subr.mxu0 0.0
          %501 = vmatpush1.msra.mxu0 0.0
          %502 = vmatprep.subr.mxu0 0.0
          %503 = vmatpush1.msra.mxu0 0.0
          %504 = vmatprep.subr.mxu0 0.0
          %505 = vmatpush1.msra.mxu0 0.0
          %506 = vmatprep.subr.mxu0 0.0
          %507 = vmatpush1.msra.mxu0 0.0
          %508 = vmatprep.subr.mxu0 0.0
          %509 = vmatpush1.msra.mxu0 0.0
          %510 = vmatprep.subr.mxu0 0.0
          %511 = vmatpush1.msra.mxu0 0.0
          %512 = vmatprep.subr.mxu0 0.0
          %513 = vmatpush1.msra.mxu0 0.0
          %514 = vmatprep.subr.mxu0 0.0
          %515 = vmatpush1.msra.mxu0 0.0
          %516 = vmatprep.subr.mxu0 0.0
          %517 = vmatpush1.msra.mxu0 0.0
          %518 = vmatprep.subr.mxu0 0.0
          %519 = vmatpush1.msra.mxu0 0.0
          %520 = vmatprep.subr.mxu0 0.0
          %521 = vmatpush1.msra.mxu0 0.0
          %522 = vmatprep.subr.mxu0 0.0
          %523 = vmatpush1.msra.mxu0 0.0
          %524 = vmatprep.subr.mxu0 0.0
          %525 = vmatpush1.msra.mxu0 0.0
          %526 = vmatprep.subr.mxu0 0.0
          %527 = vmatpush1.msra.mxu0 0.0
          %528 = vmatprep.subr.mxu0 0.0
          %529 = vmatpush1.msra.mxu0 0.0
          %530 = vmatprep.subr.mxu0 0.0
          %531 = vmatpush1.msra.mxu0 0.0
          %532 = vmatprep.subr.mxu0 0.0
          %533 = vmatpush1.msra.mxu0 0.0
          %534 = vmatprep.subr.mxu0 0.0
          %535 = vmatpush1.msra.mxu0 0.0
          %536 = vmatprep.subr.mxu0 0.0
          %537 = vmatpush1.msra.mxu0 0.0
          %538 = vmatprep.subr.mxu0 0.0
          %539 = vmatpush1.msra.mxu0 0.0
          %540 = vmatprep.subr.mxu0 0.0
          %541 = vmatpush1.msra.mxu0 0.0
          %542 = vmatprep.subr.mxu0 0.0
          %543 = vmatpush1.msra.mxu0 0.0
          %544 = vmatprep.subr.mxu0 0.0
          %545 = vmatpush1.msra.mxu0 0.0
          %546 = vmatprep.mubr.f32.mxu0 0.0
          %547 = vmatmul.mubr.f32.gmra.mrb[0].mxu0 %v346
          %v548 = vpop.f32.mrb[0].mxu0
          %v549 = vadd.f32 %v335, %v548
          %v550 = vpop.f32.mrb[0].mxu0
          %v551 = vadd.f32 %v339, %v550
          %552 = vmatprep.mubr.f32.mxu0 0.0
          %553 = vmatmul.mubr.f32.gmra.mrb[0].mxu0 %v349
          %v554 = vpop.f32.mrb[0].mxu0
          %v555 = vadd.f32 %v335, %v554
          %v556 = vpop.f32.mrb[0].mxu0
          %v557 = vadd.f32 %v339, %v556
          %558 = vmatprep.mubr.f32.mxu0 0.0
          %559 = vmatmul.mubr.f32.gmra.mrb[0].mxu0 %v352
          %v560 = vpop.f32.mrb[0].mxu0
          %v561 = vadd.f32 %v335, %v560
          %v562 = vpop.f32.mrb[0].mxu0
          %v563 = vadd.f32 %v339, %v562
          %564 = vmatprep.mubr.f32.mxu0 0.0
          %565 = vmatmul.mubr.f32.gmra.mrb[0].mxu0 %v355
          %v566 = vpop.f32.mrb[0].mxu0
          %v567 = vadd.f32 %v335, %v566
          %v568 = vpop.f32.mrb[0].mxu0
          %v569 = vadd.f32 %v339, %v568
          %570 = vmatprep.mubr.f32.mxu0 0.0
          %571 = vmatmul.mubr.f32.gmra.mrb[0].mxu0 %v358
          %v572 = vpop.f32.mrb[0].mxu0
          %v573 = vadd.f32 %v335, %v572
          %v574 = vpop.f32.mrb[0].mxu0
          %v575 = vadd.f32 %v339, %v574
          %576 = vmatprep.mubr.f32.mxu0 0.0
          %577 = vmatmul.mubr.f32.gmra.mrb[0].mxu0 %v361
          %v578 = vpop.f32.mrb[0].mxu0
          %v579 = vadd.f32 %v335, %v578
          %v580 = vpop.f32.mrb[0].mxu0
          %v581 = vadd.f32 %v339, %v580
          %582 = vmatprep.mubr.f32.mxu0 0.0
          %583 = vmatmul.mubr.f32.gmra.mrb[0].mxu0 %v364
          %v584 = vpop.f32.mrb[0].mxu0
          %v585 = vadd.f32 %v335, %v584
          %v586 = vpop.f32.mrb[0].mxu0
          %v587 = vadd.f32 %v339, %v586
          %588 = vmatprep.mubr.f32.mxu0 0.0
          %589 = vmatmul.mubr.f32.gmra.mrb[0].mxu0 %v367
          %v590 = vpop.f32.mrb[0].mxu0
          %v591 = vadd.f32 %v335, %v590
          %v592 = vpop.f32.mrb[0].mxu0
          %v593 = vadd.f32 %v339, %v592
          %594 = vdwg.mxu0
          %s595 = smul.u32 %s294, 32
          %s596 = smul.addr %s595, 8
          %s597 = scalar_lea.vmem [#allocation2], %s596
          %598 = vst [vmem:[%s597] sm:$0xff] %v436
          %599 = vst [vmem:[%s597 + $0x8] sm:$0xff] %v438
          %600 = vst [vmem:[%s597 + $0x10] sm:$0xff] %v549
          %601 = vst [vmem:[%s597 + $0x18] sm:$0xff] %v551
          %602 = vst [vmem:[%s597 + $0x20] sm:$0xff] %v442
          %603 = vst [vmem:[%s597 + $0x28] sm:$0xff] %v444
          %604 = vst [vmem:[%s597 + $0x30] sm:$0xff] %v555
          %605 = vst [vmem:[%s597 + $0x38] sm:$0xff] %v557
          %606 = vst [vmem:[%s597 + $0x40] sm:$0xff] %v448
          %607 = vst [vmem:[%s597 + $0x48] sm:$0xff] %v450
          %608 = vst [vmem:[%s597 + $0x50] sm:$0xff] %v561
          %609 = vst [vmem:[%s597 + $0x58] sm:$0xff] %v563
          %610 = vst [vmem:[%s597 + $0x60] sm:$0xff] %v454
          %611 = vst [vmem:[%s597 + $0x68] sm:$0xff] %v456
          %612 = vst [vmem:[%s597 + $0x70] sm:$0xff] %v567
          %613 = vst [vmem:[%s597 + $0x78] sm:$0xff] %v569
          %614 = vst [vmem:[%s597 + $0x80] sm:$0xff] %v460
          %615 = vst [vmem:[%s597 + $0x88] sm:$0xff] %v462
          %616 = vst [vmem:[%s597 + $0x90] sm:$0xff] %v573
          %617 = vst [vmem:[%s597 + $0x98] sm:$0xff] %v575
          %618 = vst [vmem:[%s597 + $0xa0] sm:$0xff] %v466
          %619 = vst [vmem:[%s597 + $0xa8] sm:$0xff] %v468
          %620 = vst [vmem:[%s597 + $0xb0] sm:$0xff] %v579
          %621 = vst [vmem:[%s597 + $0xb8] sm:$0xff] %v581
          %622 = vst [vmem:[%s597 + $0xc0] sm:$0xff] %v472
          %623 = vst [vmem:[%s597 + $0xc8] sm:$0xff] %v474
          %624 = vst [vmem:[%s597 + $0xd0] sm:$0xff] %v585
          %625 = vst [vmem:[%s597 + $0xd8] sm:$0xff] %v587
          %626 = vst [vmem:[%s597 + $0xe0] sm:$0xff] %v478
          %627 = vst [vmem:[%s597 + $0xe8] sm:$0xff] %v480
          %628 = vst [vmem:[%s597 + $0xf0] sm:$0xff] %v591
          %629 = vst [vmem:[%s597 + $0xf8] sm:$0xff] %v593
        $region56: #{tpu_custom_call.1} parent=43 // pred_fallthru
          _
        %p630 = scmp.gt.s32.totalorder %s24, 0
        // Predicated region
        $region57: #{tpu_custom_call.1} parent=43 // pred_check
          %p631 = pneg %p630
        $region58: #{tpu_custom_call.1} parent=43 // pred_check_branch
          %633 = sbr.rel (%p631) target = $region60
        $region59: #{tpu_custom_call.1} parent=43 // pred_region
          %v634 = vld [vmem:[#allocation5] sm:$0xff]
          %v635 = vld [vmem:[#allocation5 + $0x8] sm:$0xff]
          %v636 = vld [vmem:[#allocation5 + $0x10] sm:$0xff]
          %v637 = vld [vmem:[#allocation5 + $0x18] sm:$0xff]
          %v638 = vld [vmem:[#allocation5 + $0x20] sm:$0xff]
          %v639 = vld [vmem:[#allocation5 + $0x28] sm:$0xff]
          %v640 = vld [vmem:[#allocation5 + $0x30] sm:$0xff]
          %v641 = vld [vmem:[#allocation5 + $0x38] sm:$0xff]
          %v642 = vld [vmem:[#allocation5 + $0x40] sm:$0xff]
          %v643 = vld [vmem:[#allocation5 + $0x48] sm:$0xff]
          %v644 = vld [vmem:[#allocation5 + $0x50] sm:$0xff]
          %v645 = vld [vmem:[#allocation5 + $0x58] sm:$0xff]
          %v646 = vld [vmem:[#allocation5 + $0x60] sm:$0xff]
          %v647 = vld [vmem:[#allocation5 + $0x68] sm:$0xff]
          %v648 = vld [vmem:[#allocation5 + $0x70] sm:$0xff]
          %v649 = vld [vmem:[#allocation5 + $0x78] sm:$0xff]
          %v650 = vld [vmem:[#allocation5 + $0x80] sm:$0xff]
          %v651 = vld [vmem:[#allocation5 + $0x88] sm:$0xff]
          %v652 = vld [vmem:[#allocation5 + $0x90] sm:$0xff]
          %v653 = vld [vmem:[#allocation5 + $0x98] sm:$0xff]
          %v654 = vld [vmem:[#allocation5 + $0xa0] sm:$0xff]
          %v655 = vld [vmem:[#allocation5 + $0xa8] sm:$0xff]
          %v656 = vld [vmem:[#allocation5 + $0xb0] sm:$0xff]
          %v657 = vld [vmem:[#allocation5 + $0xb8] sm:$0xff]
          %v658 = vld [vmem:[#allocation5 + $0xc0] sm:$0xff]
          %v659 = vld [vmem:[#allocation5 + $0xc8] sm:$0xff]
          %v660 = vld [vmem:[#allocation5 + $0xd0] sm:$0xff]
          %v661 = vld [vmem:[#allocation5 + $0xd8] sm:$0xff]
          %v662 = vld [vmem:[#allocation5 + $0xe0] sm:$0xff]
          %v663 = vld [vmem:[#allocation5 + $0xe8] sm:$0xff]
          %v664 = vld [vmem:[#allocation5 + $0xf0] sm:$0xff]
          %v665 = vld [vmem:[#allocation5 + $0xf8] sm:$0xff]
          %v666 = vld [vmem:[#allocation5 + $0x100] sm:$0xff]
          %v667 = vld [vmem:[#allocation5 + $0x108] sm:$0xff]
          %v668 = vld [vmem:[#allocation5 + $0x110] sm:$0xff]
          %v669 = vld [vmem:[#allocation5 + $0x118] sm:$0xff]
          %v670 = vld [vmem:[#allocation5 + $0x120] sm:$0xff]
          %v671 = vld [vmem:[#allocation5 + $0x128] sm:$0xff]
          %v672 = vld [vmem:[#allocation5 + $0x130] sm:$0xff]
          %v673 = vld [vmem:[#allocation5 + $0x138] sm:$0xff]
          %v674 = vld [vmem:[#allocation5 + $0x140] sm:$0xff]
          %v675 = vld [vmem:[#allocation5 + $0x148] sm:$0xff]
          %v676 = vld [vmem:[#allocation5 + $0x150] sm:$0xff]
          %v677 = vld [vmem:[#allocation5 + $0x158] sm:$0xff]
          %v678 = vld [vmem:[#allocation5 + $0x160] sm:$0xff]
          %v679 = vld [vmem:[#allocation5 + $0x168] sm:$0xff]
          %v680 = vld [vmem:[#allocation5 + $0x170] sm:$0xff]
          %v681 = vld [vmem:[#allocation5 + $0x178] sm:$0xff]
          %v682 = vld [vmem:[#allocation5 + $0x180] sm:$0xff]
          %v683 = vld [vmem:[#allocation5 + $0x188] sm:$0xff]
          %v684 = vld [vmem:[#allocation5 + $0x190] sm:$0xff]
          %v685 = vld [vmem:[#allocation5 + $0x198] sm:$0xff]
          %v686 = vld [vmem:[#allocation5 + $0x1a0] sm:$0xff]
          %v687 = vld [vmem:[#allocation5 + $0x1a8] sm:$0xff]
          %v688 = vld [vmem:[#allocation5 + $0x1b0] sm:$0xff]
          %v689 = vld [vmem:[#allocation5 + $0x1b8] sm:$0xff]
          %v690 = vld [vmem:[#allocation5 + $0x1c0] sm:$0xff]
          %v691 = vld [vmem:[#allocation5 + $0x1c8] sm:$0xff]
          %v692 = vld [vmem:[#allocation5 + $0x1d0] sm:$0xff]
          %v693 = vld [vmem:[#allocation5 + $0x1d8] sm:$0xff]
          %v694 = vld [vmem:[#allocation5 + $0x1e0] sm:$0xff]
          %v695 = vld [vmem:[#allocation5 + $0x1e8] sm:$0xff]
          %v696 = vld [vmem:[#allocation5 + $0x1f0] sm:$0xff]
          %v697 = vld [vmem:[#allocation5 + $0x1f8] sm:$0xff]
          %v698 = vld [vmem:[#allocation3] sm:$0xff]
          %v699 = vld [vmem:[#allocation4] sm:$0xff]
          %s700 = smul.u32 %s295, 32
          %s701 = smul.addr %s700, 8
          %s702 = scalar_lea.vmem [#allocation2], %s701
          %v703 = vld [vmem:[%s702] sm:$0xff]
          %v704 = vld [vmem:[%s702 + $0x8] sm:$0xff]
          %v705 = vld [vmem:[%s702 + $0x10] sm:$0xff]
          %v706 = vld [vmem:[%s702 + $0x18] sm:$0xff]
          %707 = vmatprep.subr.mxu0 %v635
          %708 = vmatpush1.msra.mxu0 %v634
          %709 = vmatprep.subr.mxu0 %v639
          %710 = vmatpush1.msra.mxu0 %v638
          %711 = vmatprep.subr.mxu0 %v643
          %712 = vmatpush1.msra.mxu0 %v642
          %713 = vmatprep.subr.mxu0 %v647
          %714 = vmatpush1.msra.mxu0 %v646
          %715 = vmatprep.subr.mxu0 %v651
          %716 = vmatpush1.msra.mxu0 %v650
          %717 = vmatprep.subr.mxu0 %v655
          %718 = vmatpush1.msra.mxu0 %v654
          %719 = vmatprep.subr.mxu0 %v659
          %720 = vmatpush1.msra.mxu0 %v658
          %721 = vmatprep.subr.mxu0 %v663
          %722 = vmatpush1.msra.mxu0 %v662
          %723 = vmatprep.subr.mxu0 %v667
          %724 = vmatpush1.msra.mxu0 %v666
          %725 = vmatprep.subr.mxu0 %v671
          %726 = vmatpush1.msra.mxu0 %v670
          %727 = vmatprep.subr.mxu0 %v675
          %728 = vmatpush1.msra.mxu0 %v674
          %729 = vmatprep.subr.mxu0 %v679
          %730 = vmatpush1.msra.mxu0 %v678
          %731 = vmatprep.subr.mxu0 %v683
          %732 = vmatpush1.msra.mxu0 %v682
          %733 = vmatprep.subr.mxu0 %v687
          %734 = vmatpush1.msra.mxu0 %v686
          %735 = vmatprep.subr.mxu0 %v691
          %736 = vmatpush1.msra.mxu0 %v690
          %737 = vmatprep.subr.mxu0 %v695
          %738 = vmatpush1.msra.mxu0 %v694
          %739 = vmatprep.subr.mxu0 0.0
          %740 = vmatpush1.msra.mxu0 0.0
          %741 = vmatprep.subr.mxu0 0.0
          %742 = vmatpush1.msra.mxu0 0.0
          %743 = vmatprep.subr.mxu0 0.0
          %744 = vmatpush1.msra.mxu0 0.0
          %745 = vmatprep.subr.mxu0 0.0
          %746 = vmatpush1.msra.mxu0 0.0
          %747 = vmatprep.subr.mxu0 0.0
          %748 = vmatpush1.msra.mxu0 0.0
          %749 = vmatprep.subr.mxu0 0.0
          %750 = vmatpush1.msra.mxu0 0.0
          %751 = vmatprep.subr.mxu0 0.0
          %752 = vmatpush1.msra.mxu0 0.0
          %753 = vmatprep.subr.mxu0 0.0
          %754 = vmatpush1.msra.mxu0 0.0
          %755 = vmatprep.subr.mxu0 0.0
          %756 = vmatpush1.msra.mxu0 0.0
          %757 = vmatprep.subr.mxu0 0.0
          %758 = vmatpush1.msra.mxu0 0.0
          %759 = vmatprep.subr.mxu0 0.0
          %760 = vmatpush1.msra.mxu0 0.0
          %761 = vmatprep.subr.mxu0 0.0
          %762 = vmatpush1.msra.mxu0 0.0
          %763 = vmatprep.subr.mxu0 0.0
          %764 = vmatpush1.msra.mxu0 0.0
          %765 = vmatprep.subr.mxu0 0.0
          %766 = vmatpush1.msra.mxu0 0.0
          %767 = vmatprep.subr.mxu0 0.0
          %768 = vmatpush1.msra.mxu0 0.0
          %769 = vmatprep.subr.mxu0 0.0
          %770 = vmatpush1.msra.mxu0 0.0
          %771 = vmatprep.mubr.f32.mxu0 0.0
          %772 = vmatmul.mubr.f32.gmra.mrb[0].mxu0 %v698
          %v773 = vpop.f32.mrb[0].mxu0
          %v774 = vadd.f32 0.0, %v773
          %v775 = vpop.f32.mrb[0].mxu0
          %v776 = vadd.f32 0.0, %v775
          %777 = vdwg.mxu0
          %778 = vmatprep.subr.mxu0 %v637
          %779 = vmatpush1.msra.mxu0 %v636
          %780 = vmatprep.subr.mxu0 %v641
          %781 = vmatpush1.msra.mxu0 %v640
          %782 = vmatprep.subr.mxu0 %v645
          %783 = vmatpush1.msra.mxu0 %v644
          %784 = vmatprep.subr.mxu0 %v649
          %785 = vmatpush1.msra.mxu0 %v648
          %786 = vmatprep.subr.mxu0 %v653
          %787 = vmatpush1.msra.mxu0 %v652
          %788 = vmatprep.subr.mxu0 %v657
          %789 = vmatpush1.msra.mxu0 %v656
          %790 = vmatprep.subr.mxu0 %v661
          %791 = vmatpush1.msra.mxu0 %v660
          %792 = vmatprep.subr.mxu0 %v665
          %793 = vmatpush1.msra.mxu0 %v664
          %794 = vmatprep.subr.mxu0 %v669
          %795 = vmatpush1.msra.mxu0 %v668
          %796 = vmatprep.subr.mxu0 %v673
          %797 = vmatpush1.msra.mxu0 %v672
          %798 = vmatprep.subr.mxu0 %v677
          %799 = vmatpush1.msra.mxu0 %v676
          %800 = vmatprep.subr.mxu0 %v681
          %801 = vmatpush1.msra.mxu0 %v680
          %802 = vmatprep.subr.mxu0 %v685
          %803 = vmatpush1.msra.mxu0 %v684
          %804 = vmatprep.subr.mxu0 %v689
          %805 = vmatpush1.msra.mxu0 %v688
          %806 = vmatprep.subr.mxu0 %v693
          %807 = vmatpush1.msra.mxu0 %v692
          %808 = vmatprep.subr.mxu0 %v697
          %809 = vmatpush1.msra.mxu0 %v696
          %810 = vmatprep.subr.mxu0 0.0
          %811 = vmatpush1.msra.mxu0 0.0
          %812 = vmatprep.subr.mxu0 0.0
          %813 = vmatpush1.msra.mxu0 0.0
          %814 = vmatprep.subr.mxu0 0.0
          %815 = vmatpush1.msra.mxu0 0.0
          %816 = vmatprep.subr.mxu0 0.0
          %817 = vmatpush1.msra.mxu0 0.0
          %818 = vmatprep.subr.mxu0 0.0
          %819 = vmatpush1.msra.mxu0 0.0
          %820 = vmatprep.subr.mxu0 0.0
          %821 = vmatpush1.msra.mxu0 0.0
          %822 = vmatprep.subr.mxu0 0.0
          %823 = vmatpush1.msra.mxu0 0.0
          %824 = vmatprep.subr.mxu0 0.0
          %825 = vmatpush1.msra.mxu0 0.0
          %826 = vmatprep.subr.mxu0 0.0
          %827 = vmatpush1.msra.mxu0 0.0
          %828 = vmatprep.subr.mxu0 0.0
          %829 = vmatpush1.msra.mxu0 0.0
          %830 = vmatprep.subr.mxu0 0.0
          %831 = vmatpush1.msra.mxu0 0.0
          %832 = vmatprep.subr.mxu0 0.0
          %833 = vmatpush1.msra.mxu0 0.0
          %834 = vmatprep.subr.mxu0 0.0
          %835 = vmatpush1.msra.mxu0 0.0
          %836 = vmatprep.subr.mxu0 0.0
          %837 = vmatpush1.msra.mxu0 0.0
          %838 = vmatprep.subr.mxu0 0.0
          %839 = vmatpush1.msra.mxu0 0.0
          %840 = vmatprep.subr.mxu0 0.0
          %841 = vmatpush1.msra.mxu0 0.0
          %842 = vmatprep.mubr.f32.mxu0 0.0
          %843 = vmatmul.mubr.f32.gmra.mrb[0].mxu0 %v698
          %v844 = vpop.f32.mrb[0].mxu0
          %v845 = vadd.f32 0.0, %v844
          %v846 = vpop.f32.mrb[0].mxu0
          %v847 = vadd.f32 0.0, %v846
          %848 = vdwg.mxu0
          %v849 = vadd.f32 %v703, %v774
          %v850 = vadd.f32 %v704, %v776
          %v851 = vadd.f32 %v705, %v845
          %v852 = vadd.f32 %v706, %v847
          %v853 = vxor.u32 %v849, 2147483648
          %v854 = vxor.u32 %v850, 2147483648
          %v855 = vxor.u32 %v851, 2147483648
          %v856 = vmul.f32 %v853, 1.442695
          %v857 = vpow.pop %v856
          %v858 = vmul.f32 %v854, 1.442695
          %v859 = vpow.pop %v858
          %v860 = vmul.f32 %v855, 1.442695
          %v861 = vpow.pop %v860
          %v862 = vadd.f32 %v857, 1.0
          %v863 = vadd.f32 %v859, 1.0
          %v864 = vadd.f32 %v861, 1.0
          %v865 = vrcp.pop %v862
          %v866 = vmul.f32 1.0, %v865
          %v867 = vrcp.pop %v863
          %v868 = vmul.f32 1.0, %v867
          %v869 = vrcp.pop %v864
          %v870 = vmul.f32 1.0, %v869
          %v871 = vtanh.pop %v852
          %v872 = vmul.f32 %v868, %v699
          %v873 = vmul.f32 %v866, %v871
          %v874 = vadd.f32 %v872, %v873
          %v875 = vtanh.pop %v874
          %v876 = vmul.f32 %v870, %v875
          %s877 = sadd.s32 4, %s700
          %s878 = smul.addr %s877, 8
          %s879 = scalar_lea.vmem [#allocation2], %s878
          %v880 = vld [vmem:[%s879] sm:$0xff]
          %v881 = vld [vmem:[%s879 + $0x8] sm:$0xff]
          %v882 = vld [vmem:[%s879 + $0x10] sm:$0xff]
          %v883 = vld [vmem:[%s879 + $0x18] sm:$0xff]
          %884 = vmatprep.subr.mxu0 %v635
          %885 = vmatpush1.msra.mxu0 %v634
          %886 = vmatprep.subr.mxu0 %v639
          %887 = vmatpush1.msra.mxu0 %v638
          %888 = vmatprep.subr.mxu0 %v643
          %889 = vmatpush1.msra.mxu0 %v642
          %890 = vmatprep.subr.mxu0 %v647
          %891 = vmatpush1.msra.mxu0 %v646
          %892 = vmatprep.subr.mxu0 %v651
          %893 = vmatpush1.msra.mxu0 %v650
          %894 = vmatprep.subr.mxu0 %v655
          %895 = vmatpush1.msra.mxu0 %v654
          %896 = vmatprep.subr.mxu0 %v659
          %897 = vmatpush1.msra.mxu0 %v658
          %898 = vmatprep.subr.mxu0 %v663
          %899 = vmatpush1.msra.mxu0 %v662
          %900 = vmatprep.subr.mxu0 %v667
          %901 = vmatpush1.msra.mxu0 %v666
          %902 = vmatprep.subr.mxu0 %v671
          %903 = vmatpush1.msra.mxu0 %v670
          %904 = vmatprep.subr.mxu0 %v675
          %905 = vmatpush1.msra.mxu0 %v674
          %906 = vmatprep.subr.mxu0 %v679
          %907 = vmatpush1.msra.mxu0 %v678
          %908 = vmatprep.subr.mxu0 %v683
          %909 = vmatpush1.msra.mxu0 %v682
          %910 = vmatprep.subr.mxu0 %v687
          %911 = vmatpush1.msra.mxu0 %v686
          %912 = vmatprep.subr.mxu0 %v691
          %913 = vmatpush1.msra.mxu0 %v690
          %914 = vmatprep.subr.mxu0 %v695
          %915 = vmatpush1.msra.mxu0 %v694
          %916 = vmatprep.subr.mxu0 0.0
          %917 = vmatpush1.msra.mxu0 0.0
          %918 = vmatprep.subr.mxu0 0.0
          %919 = vmatpush1.msra.mxu0 0.0
          %920 = vmatprep.subr.mxu0 0.0
          %921 = vmatpush1.msra.mxu0 0.0
          %922 = vmatprep.subr.mxu0 0.0
          %923 = vmatpush1.msra.mxu0 0.0
          %924 = vmatprep.subr.mxu0 0.0
          %925 = vmatpush1.msra.mxu0 0.0
          %926 = vmatprep.subr.mxu0 0.0
          %927 = vmatpush1.msra.mxu0 0.0
          %928 = vmatprep.subr.mxu0 0.0
          %929 = vmatpush1.msra.mxu0 0.0
          %930 = vmatprep.subr.mxu0 0.0
          %931 = vmatpush1.msra.mxu0 0.0
          %932 = vmatprep.subr.mxu0 0.0
          %933 = vmatpush1.msra.mxu0 0.0
          %934 = vmatprep.subr.mxu0 0.0
          %935 = vmatpush1.msra.mxu0 0.0
          %936 = vmatprep.subr.mxu0 0.0
          %937 = vmatpush1.msra.mxu0 0.0
          %938 = vmatprep.subr.mxu0 0.0
          %939 = vmatpush1.msra.mxu0 0.0
          %940 = vmatprep.subr.mxu0 0.0
          %941 = vmatpush1.msra.mxu0 0.0
          %942 = vmatprep.subr.mxu0 0.0
          %943 = vmatpush1.msra.mxu0 0.0
          %944 = vmatprep.subr.mxu0 0.0
          %945 = vmatpush1.msra.mxu0 0.0
          %946 = vmatprep.subr.mxu0 0.0
          %947 = vmatpush1.msra.mxu0 0.0
          %948 = vmatprep.mubr.f32.mxu0 0.0
          %949 = vmatmul.mubr.f32.gmra.mrb[0].mxu0 %v876
          %v950 = vpop.f32.mrb[0].mxu0
          %v951 = vadd.f32 0.0, %v950
          %v952 = vpop.f32.mrb[0].mxu0
          %v953 = vadd.f32 0.0, %v952
          %954 = vdwg.mxu0
          %955 = vmatprep.subr.mxu0 %v637
          %956 = vmatpush1.msra.mxu0 %v636
          %957 = vmatprep.subr.mxu0 %v641
          %958 = vmatpush1.msra.mxu0 %v640
          %959 = vmatprep.subr.mxu0 %v645
          %960 = vmatpush1.msra.mxu0 %v644
          %961 = vmatprep.subr.mxu0 %v649
          %962 = vmatpush1.msra.mxu0 %v648
          %963 = vmatprep.subr.mxu0 %v653
          %964 = vmatpush1.msra.mxu0 %v652
          %965 = vmatprep.subr.mxu0 %v657
          %966 = vmatpush1.msra.mxu0 %v656
          %967 = vmatprep.subr.mxu0 %v661
          %968 = vmatpush1.msra.mxu0 %v660
          %969 = vmatprep.subr.mxu0 %v665
          %970 = vmatpush1.msra.mxu0 %v664
          %971 = vmatprep.subr.mxu0 %v669
          %972 = vmatpush1.msra.mxu0 %v668
          %973 = vmatprep.subr.mxu0 %v673
          %974 = vmatpush1.msra.mxu0 %v672
          %975 = vmatprep.subr.mxu0 %v677
          %976 = vmatpush1.msra.mxu0 %v676
          %977 = vmatprep.subr.mxu0 %v681
          %978 = vmatpush1.msra.mxu0 %v680
          %979 = vmatprep.subr.mxu0 %v685
          %980 = vmatpush1.msra.mxu0 %v684
          %981 = vmatprep.subr.mxu0 %v689
          %982 = vmatpush1.msra.mxu0 %v688
          %983 = vmatprep.subr.mxu0 %v693
          %984 = vmatpush1.msra.mxu0 %v692
          %985 = vmatprep.subr.mxu0 %v697
          %986 = vmatpush1.msra.mxu0 %v696
          %987 = vmatprep.subr.mxu0 0.0
          %988 = vmatpush1.msra.mxu0 0.0
          %989 = vmatprep.subr.mxu0 0.0
          %990 = vmatpush1.msra.mxu0 0.0
          %991 = vmatprep.subr.mxu0 0.0
          %992 = vmatpush1.msra.mxu0 0.0
          %993 = vmatprep.subr.mxu0 0.0
          %994 = vmatpush1.msra.mxu0 0.0
          %995 = vmatprep.subr.mxu0 0.0
          %996 = vmatpush1.msra.mxu0 0.0
          %997 = vmatprep.subr.mxu0 0.0
          %998 = vmatpush1.msra.mxu0 0.0
          %999 = vmatprep.subr.mxu0 0.0
          %1000 = vmatpush1.msra.mxu0 0.0
          %1001 = vmatprep.subr.mxu0 0.0
          %1002 = vmatpush1.msra.mxu0 0.0
          %1003 = vmatprep.subr.mxu0 0.0
          %1004 = vmatpush1.msra.mxu0 0.0
          %1005 = vmatprep.subr.mxu0 0.0
          %1006 = vmatpush1.msra.mxu0 0.0
          %1007 = vmatprep.subr.mxu0 0.0
          %1008 = vmatpush1.msra.mxu0 0.0
          %1009 = vmatprep.subr.mxu0 0.0
          %1010 = vmatpush1.msra.mxu0 0.0
          %1011 = vmatprep.subr.mxu0 0.0
          %1012 = vmatpush1.msra.mxu0 0.0
          %1013 = vmatprep.subr.mxu0 0.0
          %1014 = vmatpush1.msra.mxu0 0.0
          %1015 = vmatprep.subr.mxu0 0.0
          %1016 = vmatpush1.msra.mxu0 0.0
          %1017 = vmatprep.subr.mxu0 0.0
          %1018 = vmatpush1.msra.mxu0 0.0
          %1019 = vmatprep.mubr.f32.mxu0 0.0
          %1020 = vmatmul.mubr.f32.gmra.mrb[0].mxu0 %v876
          %v1021 = vpop.f32.mrb[0].mxu0
          %v1022 = vadd.f32 0.0, %v1021
          %v1023 = vpop.f32.mrb[0].mxu0
          %v1024 = vadd.f32 0.0, %v1023
          %1025 = vdwg.mxu0
          %v1026 = vadd.f32 %v880, %v951
          %v1027 = vadd.f32 %v881, %v953
          %v1028 = vadd.f32 %v882, %v1022
          %v1029 = vadd.f32 %v883, %v1024
          %v1030 = vxor.u32 %v1026, 2147483648
          %v1031 = vxor.u32 %v1027, 2147483648
          %v1032 = vxor.u32 %v1028, 2147483648
          %v1033 = vmul.f32 %v1030, 1.442695
          %v1034 = vpow.pop %v1033
          %v1035 = vmul.f32 %v1031, 1.442695
          %v1036 = vpow.pop %v1035
          %v1037 = vmul.f32 %v1032, 1.442695
          %v1038 = vpow.pop %v1037
          %v1039 = vadd.f32 %v1034, 1.0
          %v1040 = vadd.f32 %v1036, 1.0
          %v1041 = vadd.f32 %v1038, 1.0
          %v1042 = vrcp.pop %v1039
          %v1043 = vmul.f32 1.0, %v1042
          %v1044 = vrcp.pop %v1040
          %v1045 = vmul.f32 1.0, %v1044
          %v1046 = vrcp.pop %v1041
          %v1047 = vmul.f32 1.0, %v1046
          %v1048 = vtanh.pop %v1029
          %v1049 = vmul.f32 %v1045, %v874
          %v1050 = vmul.f32 %v1043, %v1048
          %v1051 = vadd.f32 %v1049, %v1050
          %v1052 = vtanh.pop %v1051
          %v1053 = vmul.f32 %v1047, %v1052
          %s1054 = sadd.s32 8, %s700
          %s1055 = smul.addr %s1054, 8
          %s1056 = scalar_lea.vmem [#allocation2], %s1055
          %v1057 = vld [vmem:[%s1056] sm:$0xff]
          %v1058 = vld [vmem:[%s1056 + $0x8] sm:$0xff]
          %v1059 = vld [vmem:[%s1056 + $0x10] sm:$0xff]
          %v1060 = vld [vmem:[%s1056 + $0x18] sm:$0xff]
          %1061 = vmatprep.subr.mxu0 %v635
          %1062 = vmatpush1.msra.mxu0 %v634
          %1063 = vmatprep.subr.mxu0 %v639
          %1064 = vmatpush1.msra.mxu0 %v638
          %1065 = vmatprep.subr.mxu0 %v643
          %1066 = vmatpush1.msra.mxu0 %v642
          %1067 = vmatprep.subr.mxu0 %v647
          %1068 = vmatpush1.msra.mxu0 %v646
          %1069 = vmatprep.subr.mxu0 %v651
          %1070 = vmatpush1.msra.mxu0 %v650
          %1071 = vmatprep.subr.mxu0 %v655
          %1072 = vmatpush1.msra.mxu0 %v654
          %1073 = vmatprep.subr.mxu0 %v659
          %1074 = vmatpush1.msra.mxu0 %v658
          %1075 = vmatprep.subr.mxu0 %v663
          %1076 = vmatpush1.msra.mxu0 %v662
          %1077 = vmatprep.subr.mxu0 %v667
          %1078 = vmatpush1.msra.mxu0 %v666
          %1079 = vmatprep.subr.mxu0 %v671
          %1080 = vmatpush1.msra.mxu0 %v670
          %1081 = vmatprep.subr.mxu0 %v675
          %1082 = vmatpush1.msra.mxu0 %v674
          %1083 = vmatprep.subr.mxu0 %v679
          %1084 = vmatpush1.msra.mxu0 %v678
          %1085 = vmatprep.subr.mxu0 %v683
          %1086 = vmatpush1.msra.mxu0 %v682
          %1087 = vmatprep.subr.mxu0 %v687
          %1088 = vmatpush1.msra.mxu0 %v686
          %1089 = vmatprep.subr.mxu0 %v691
          %1090 = vmatpush1.msra.mxu0 %v690
          %1091 = vmatprep.subr.mxu0 %v695
          %1092 = vmatpush1.msra.mxu0 %v694
          %1093 = vmatprep.subr.mxu0 0.0
          %1094 = vmatpush1.msra.mxu0 0.0
          %1095 = vmatprep.subr.mxu0 0.0
          %1096 = vmatpush1.msra.mxu0 0.0
          %1097 = vmatprep.subr.mxu0 0.0
          %1098 = vmatpush1.msra.mxu0 0.0
          %1099 = vmatprep.subr.mxu0 0.0
          %1100 = vmatpush1.msra.mxu0 0.0
          %1101 = vmatprep.subr.mxu0 0.0
          %1102 = vmatpush1.msra.mxu0 0.0
          %1103 = vmatprep.subr.mxu0 0.0
          %1104 = vmatpush1.msra.mxu0 0.0
          %1105 = vmatprep.subr.mxu0 0.0
          %1106 = vmatpush1.msra.mxu0 0.0
          %1107 = vmatprep.subr.mxu0 0.0
          %1108 = vmatpush1.msra.mxu0 0.0
          %1109 = vmatprep.subr.mxu0 0.0
          %1110 = vmatpush1.msra.mxu0 0.0
          %1111 = vmatprep.subr.mxu0 0.0
          %1112 = vmatpush1.msra.mxu0 0.0
          %1113 = vmatprep.subr.mxu0 0.0
          %1114 = vmatpush1.msra.mxu0 0.0
          %1115 = vmatprep.subr.mxu0 0.0
          %1116 = vmatpush1.msra.mxu0 0.0
          %1117 = vmatprep.subr.mxu0 0.0
          %1118 = vmatpush1.msra.mxu0 0.0
          %1119 = vmatprep.subr.mxu0 0.0
          %1120 = vmatpush1.msra.mxu0 0.0
          %1121 = vmatprep.subr.mxu0 0.0
          %1122 = vmatpush1.msra.mxu0 0.0
          %1123 = vmatprep.subr.mxu0 0.0
          %1124 = vmatpush1.msra.mxu0 0.0
          %1125 = vmatprep.mubr.f32.mxu0 0.0
          %1126 = vmatmul.mubr.f32.gmra.mrb[0].mxu0 %v1053
          %v1127 = vpop.f32.mrb[0].mxu0
          %v1128 = vadd.f32 0.0, %v1127
          %v1129 = vpop.f32.mrb[0].mxu0
          %v1130 = vadd.f32 0.0, %v1129
          %1131 = vdwg.mxu0
          %1132 = vmatprep.subr.mxu0 %v637
          %1133 = vmatpush1.msra.mxu0 %v636
          %1134 = vmatprep.subr.mxu0 %v641
          %1135 = vmatpush1.msra.mxu0 %v640
          %1136 = vmatprep.subr.mxu0 %v645
          %1137 = vmatpush1.msra.mxu0 %v644
          %1138 = vmatprep.subr.mxu0 %v649
          %1139 = vmatpush1.msra.mxu0 %v648
          %1140 = vmatprep.subr.mxu0 %v653
          %1141 = vmatpush1.msra.mxu0 %v652
          %1142 = vmatprep.subr.mxu0 %v657
          %1143 = vmatpush1.msra.mxu0 %v656
          %1144 = vmatprep.subr.mxu0 %v661
          %1145 = vmatpush1.msra.mxu0 %v660
          %1146 = vmatprep.subr.mxu0 %v665
          %1147 = vmatpush1.msra.mxu0 %v664
          %1148 = vmatprep.subr.mxu0 %v669
          %1149 = vmatpush1.msra.mxu0 %v668
          %1150 = vmatprep.subr.mxu0 %v673
          %1151 = vmatpush1.msra.mxu0 %v672
          %1152 = vmatprep.subr.mxu0 %v677
          %1153 = vmatpush1.msra.mxu0 %v676
          %1154 = vmatprep.subr.mxu0 %v681
          %1155 = vmatpush1.msra.mxu0 %v680
          %1156 = vmatprep.subr.mxu0 %v685
          %1157 = vmatpush1.msra.mxu0 %v684
          %1158 = vmatprep.subr.mxu0 %v689
          %1159 = vmatpush1.msra.mxu0 %v688
          %1160 = vmatprep.subr.mxu0 %v693
          %1161 = vmatpush1.msra.mxu0 %v692
          %1162 = vmatprep.subr.mxu0 %v697
          %1163 = vmatpush1.msra.mxu0 %v696
          %1164 = vmatprep.subr.mxu0 0.0
          %1165 = vmatpush1.msra.mxu0 0.0
          %1166 = vmatprep.subr.mxu0 0.0
          %1167 = vmatpush1.msra.mxu0 0.0
          %1168 = vmatprep.subr.mxu0 0.0
          %1169 = vmatpush1.msra.mxu0 0.0
          %1170 = vmatprep.subr.mxu0 0.0
          %1171 = vmatpush1.msra.mxu0 0.0
          %1172 = vmatprep.subr.mxu0 0.0
          %1173 = vmatpush1.msra.mxu0 0.0
          %1174 = vmatprep.subr.mxu0 0.0
          %1175 = vmatpush1.msra.mxu0 0.0
          %1176 = vmatprep.subr.mxu0 0.0
          %1177 = vmatpush1.msra.mxu0 0.0
          %1178 = vmatprep.subr.mxu0 0.0
          %1179 = vmatpush1.msra.mxu0 0.0
          %1180 = vmatprep.subr.mxu0 0.0
          %1181 = vmatpush1.msra.mxu0 0.0
          %1182 = vmatprep.subr.mxu0 0.0
          %1183 = vmatpush1.msra.mxu0 0.0
          %1184 = vmatprep.subr.mxu0 0.0
          %1185 = vmatpush1.msra.mxu0 0.0
          %1186 = vmatprep.subr.mxu0 0.0
          %1187 = vmatpush1.msra.mxu0 0.0
          %1188 = vmatprep.subr.mxu0 0.0
          %1189 = vmatpush1.msra.mxu0 0.0
          %1190 = vmatprep.subr.mxu0 0.0
          %1191 = vmatpush1.msra.mxu0 0.0
          %1192 = vmatprep.subr.mxu0 0.0
          %1193 = vmatpush1.msra.mxu0 0.0
          %1194 = vmatprep.subr.mxu0 0.0
          %1195 = vmatpush1.msra.mxu0 0.0
          %1196 = vmatprep.mubr.f32.mxu0 0.0
          %1197 = vmatmul.mubr.f32.gmra.mrb[0].mxu0 %v1053
          %v1198 = vpop.f32.mrb[0].mxu0
          %v1199 = vadd.f32 0.0, %v1198
          %v1200 = vpop.f32.mrb[0].mxu0
          %v1201 = vadd.f32 0.0, %v1200
          %1202 = vdwg.mxu0
          %v1203 = vadd.f32 %v1057, %v1128
          %v1204 = vadd.f32 %v1058, %v1130
          %v1205 = vadd.f32 %v1059, %v1199
          %v1206 = vadd.f32 %v1060, %v1201
          %v1207 = vxor.u32 %v1203, 2147483648
          %v1208 = vxor.u32 %v1204, 2147483648
          %v1209 = vxor.u32 %v1205, 2147483648
          %v1210 = vmul.f32 %v1207, 1.442695
          %v1211 = vpow.pop %v1210
          %v1212 = vmul.f32 %v1208, 1.442695
          %v1213 = vpow.pop %v1212
          %v1214 = vmul.f32 %v1209, 1.442695
          %v1215 = vpow.pop %v1214
          %v1216 = vadd.f32 %v1211, 1.0
          %v1217 = vadd.f32 %v1213, 1.0
          %v1218 = vadd.f32 %v1215, 1.0
          %v1219 = vrcp.pop %v1216
          %v1220 = vmul.f32 1.0, %v1219
          %v1221 = vrcp.pop %v1217
          %v1222 = vmul.f32 1.0, %v1221
          %v1223 = vrcp.pop %v1218
          %v1224 = vmul.f32 1.0, %v1223
          %v1225 = vtanh.pop %v1206
          %v1226 = vmul.f32 %v1222, %v1051
          %v1227 = vmul.f32 %v1220, %v1225
          %v1228 = vadd.f32 %v1226, %v1227
          %v1229 = vtanh.pop %v1228
          %v1230 = vmul.f32 %v1224, %v1229
          %s1231 = sadd.s32 12, %s700
          %s1232 = smul.addr %s1231, 8
          %s1233 = scalar_lea.vmem [#allocation2], %s1232
          %v1234 = vld [vmem:[%s1233] sm:$0xff]
          %v1235 = vld [vmem:[%s1233 + $0x8] sm:$0xff]
          %v1236 = vld [vmem:[%s1233 + $0x10] sm:$0xff]
          %v1237 = vld [vmem:[%s1233 + $0x18] sm:$0xff]
          %1238 = vmatprep.subr.mxu0 %v635
          %1239 = vmatpush1.msra.mxu0 %v634
          %1240 = vmatprep.subr.mxu0 %v639
          %1241 = vmatpush1.msra.mxu0 %v638
          %1242 = vmatprep.subr.mxu0 %v643
          %1243 = vmatpush1.msra.mxu0 %v642
          %1244 = vmatprep.subr.mxu0 %v647
          %1245 = vmatpush1.msra.mxu0 %v646
          %1246 = vmatprep.subr.mxu0 %v651
          %1247 = vmatpush1.msra.mxu0 %v650
          %1248 = vmatprep.subr.mxu0 %v655
          %1249 = vmatpush1.msra.mxu0 %v654
          %1250 = vmatprep.subr.mxu0 %v659
          %1251 = vmatpush1.msra.mxu0 %v658
          %1252 = vmatprep.subr.mxu0 %v663
          %1253 = vmatpush1.msra.mxu0 %v662
          %1254 = vmatprep.subr.mxu0 %v667
          %1255 = vmatpush1.msra.mxu0 %v666
          %1256 = vmatprep.subr.mxu0 %v671
          %1257 = vmatpush1.msra.mxu0 %v670
          %1258 = vmatprep.subr.mxu0 %v675
          %1259 = vmatpush1.msra.mxu0 %v674
          %1260 = vmatprep.subr.mxu0 %v679
          %1261 = vmatpush1.msra.mxu0 %v678
          %1262 = vmatprep.subr.mxu0 %v683
          %1263 = vmatpush1.msra.mxu0 %v682
          %1264 = vmatprep.subr.mxu0 %v687
          %1265 = vmatpush1.msra.mxu0 %v686
          %1266 = vmatprep.subr.mxu0 %v691
          %1267 = vmatpush1.msra.mxu0 %v690
          %1268 = vmatprep.subr.mxu0 %v695
          %1269 = vmatpush1.msra.mxu0 %v694
          %1270 = vmatprep.subr.mxu0 0.0
          %1271 = vmatpush1.msra.mxu0 0.0
          %1272 = vmatprep.subr.mxu0 0.0
          %1273 = vmatpush1.msra.mxu0 0.0
          %1274 = vmatprep.subr.mxu0 0.0
          %1275 = vmatpush1.msra.mxu0 0.0
          %1276 = vmatprep.subr.mxu0 0.0
          %1277 = vmatpush1.msra.mxu0 0.0
          %1278 = vmatprep.subr.mxu0 0.0
          %1279 = vmatpush1.msra.mxu0 0.0
          %1280 = vmatprep.subr.mxu0 0.0
          %1281 = vmatpush1.msra.mxu0 0.0
          %1282 = vmatprep.subr.mxu0 0.0
          %1283 = vmatpush1.msra.mxu0 0.0
          %1284 = vmatprep.subr.mxu0 0.0
          %1285 = vmatpush1.msra.mxu0 0.0
          %1286 = vmatprep.subr.mxu0 0.0
          %1287 = vmatpush1.msra.mxu0 0.0
          %1288 = vmatprep.subr.mxu0 0.0
          %1289 = vmatpush1.msra.mxu0 0.0
          %1290 = vmatprep.subr.mxu0 0.0
          %1291 = vmatpush1.msra.mxu0 0.0
          %1292 = vmatprep.subr.mxu0 0.0
          %1293 = vmatpush1.msra.mxu0 0.0
          %1294 = vmatprep.subr.mxu0 0.0
          %1295 = vmatpush1.msra.mxu0 0.0
          %1296 = vmatprep.subr.mxu0 0.0
          %1297 = vmatpush1.msra.mxu0 0.0
          %1298 = vmatprep.subr.mxu0 0.0
          %1299 = vmatpush1.msra.mxu0 0.0
          %1300 = vmatprep.subr.mxu0 0.0
          %1301 = vmatpush1.msra.mxu0 0.0
          %1302 = vmatprep.mubr.f32.mxu0 0.0
          %1303 = vmatmul.mubr.f32.gmra.mrb[0].mxu0 %v1230
          %v1304 = vpop.f32.mrb[0].mxu0
          %v1305 = vadd.f32 0.0, %v1304
          %v1306 = vpop.f32.mrb[0].mxu0
          %v1307 = vadd.f32 0.0, %v1306
          %1308 = vdwg.mxu0
          %1309 = vmatprep.subr.mxu0 %v637
          %1310 = vmatpush1.msra.mxu0 %v636
          %1311 = vmatprep.subr.mxu0 %v641
          %1312 = vmatpush1.msra.mxu0 %v640
          %1313 = vmatprep.subr.mxu0 %v645
          %1314 = vmatpush1.msra.mxu0 %v644
          %1315 = vmatprep.subr.mxu0 %v649
          %1316 = vmatpush1.msra.mxu0 %v648
          %1317 = vmatprep.subr.mxu0 %v653
          %1318 = vmatpush1.msra.mxu0 %v652
          %1319 = vmatprep.subr.mxu0 %v657
          %1320 = vmatpush1.msra.mxu0 %v656
          %1321 = vmatprep.subr.mxu0 %v661
          %1322 = vmatpush1.msra.mxu0 %v660
          %1323 = vmatprep.subr.mxu0 %v665
          %1324 = vmatpush1.msra.mxu0 %v664
          %1325 = vmatprep.subr.mxu0 %v669
          %1326 = vmatpush1.msra.mxu0 %v668
          %1327 = vmatprep.subr.mxu0 %v673
          %1328 = vmatpush1.msra.mxu0 %v672
          %1329 = vmatprep.subr.mxu0 %v677
          %1330 = vmatpush1.msra.mxu0 %v676
          %1331 = vmatprep.subr.mxu0 %v681
          %1332 = vmatpush1.msra.mxu0 %v680
          %1333 = vmatprep.subr.mxu0 %v685
          %1334 = vmatpush1.msra.mxu0 %v684
          %1335 = vmatprep.subr.mxu0 %v689
          %1336 = vmatpush1.msra.mxu0 %v688
          %1337 = vmatprep.subr.mxu0 %v693
          %1338 = vmatpush1.msra.mxu0 %v692
          %1339 = vmatprep.subr.mxu0 %v697
          %1340 = vmatpush1.msra.mxu0 %v696
          %1341 = vmatprep.subr.mxu0 0.0
          %1342 = vmatpush1.msra.mxu0 0.0
          %1343 = vmatprep.subr.mxu0 0.0
          %1344 = vmatpush1.msra.mxu0 0.0
          %1345 = vmatprep.subr.mxu0 0.0
          %1346 = vmatpush1.msra.mxu0 0.0
          %1347 = vmatprep.subr.mxu0 0.0
          %1348 = vmatpush1.msra.mxu0 0.0
          %1349 = vmatprep.subr.mxu0 0.0
          %1350 = vmatpush1.msra.mxu0 0.0
          %1351 = vmatprep.subr.mxu0 0.0
          %1352 = vmatpush1.msra.mxu0 0.0
          %1353 = vmatprep.subr.mxu0 0.0
          %1354 = vmatpush1.msra.mxu0 0.0
          %1355 = vmatprep.subr.mxu0 0.0
          %1356 = vmatpush1.msra.mxu0 0.0
          %1357 = vmatprep.subr.mxu0 0.0
          %1358 = vmatpush1.msra.mxu0 0.0
          %1359 = vmatprep.subr.mxu0 0.0
          %1360 = vmatpush1.msra.mxu0 0.0
          %1361 = vmatprep.subr.mxu0 0.0
          %1362 = vmatpush1.msra.mxu0 0.0
          %1363 = vmatprep.subr.mxu0 0.0
          %1364 = vmatpush1.msra.mxu0 0.0
          %1365 = vmatprep.subr.mxu0 0.0
          %1366 = vmatpush1.msra.mxu0 0.0
          %1367 = vmatprep.subr.mxu0 0.0
          %1368 = vmatpush1.msra.mxu0 0.0
          %1369 = vmatprep.subr.mxu0 0.0
          %1370 = vmatpush1.msra.mxu0 0.0
          %1371 = vmatprep.subr.mxu0 0.0
          %1372 = vmatpush1.msra.mxu0 0.0
          %1373 = vmatprep.mubr.f32.mxu0 0.0
          %1374 = vmatmul.mubr.f32.gmra.mrb[0].mxu0 %v1230
          %v1375 = vpop.f32.mrb[0].mxu0
          %v1376 = vadd.f32 0.0, %v1375
          %v1377 = vpop.f32.mrb[0].mxu0
          %v1378 = vadd.f32 0.0, %v1377
          %1379 = vdwg.mxu0
          %v1380 = vadd.f32 %v1234, %v1305
          %v1381 = vadd.f32 %v1235, %v1307
          %v1382 = vadd.f32 %v1236, %v1376
          %v1383 = vadd.f32 %v1237, %v1378
          %v1384 = vxor.u32 %v1380, 2147483648
          %v1385 = vxor.u32 %v1381, 2147483648
          %v1386 = vxor.u32 %v1382, 2147483648
          %v1387 = vmul.f32 %v1384, 1.442695
          %v1388 = vpow.pop %v1387
          %v1389 = vmul.f32 %v1385, 1.442695
          %v1390 = vpow.pop %v1389
          %v1391 = vmul.f32 %v1386, 1.442695
          %v1392 = vpow.pop %v1391
          %v1393 = vadd.f32 %v1388, 1.0
          %v1394 = vadd.f32 %v1390, 1.0
          %v1395 = vadd.f32 %v1392, 1.0
          %v1396 = vrcp.pop %v1393
          %v1397 = vmul.f32 1.0, %v1396
          %v1398 = vrcp.pop %v1394
          %v1399 = vmul.f32 1.0, %v1398
          %v1400 = vrcp.pop %v1395
          %v1401 = vmul.f32 1.0, %v1400
          %v1402 = vtanh.pop %v1383
          %v1403 = vmul.f32 %v1399, %v1228
          %v1404 = vmul.f32 %v1397, %v1402
          %v1405 = vadd.f32 %v1403, %v1404
          %v1406 = vtanh.pop %v1405
          %v1407 = vmul.f32 %v1401, %v1406
          %s1408 = sadd.s32 16, %s700
          %s1409 = smul.addr %s1408, 8
          %s1410 = scalar_lea.vmem [#allocation2], %s1409
          %v1411 = vld [vmem:[%s1410] sm:$0xff]
          %v1412 = vld [vmem:[%s1410 + $0x8] sm:$0xff]
          %v1413 = vld [vmem:[%s1410 + $0x10] sm:$0xff]
          %v1414 = vld [vmem:[%s1410 + $0x18] sm:$0xff]
          %1415 = vmatprep.subr.mxu0 %v635
          %1416 = vmatpush1.msra.mxu0 %v634
          %1417 = vmatprep.subr.mxu0 %v639
          %1418 = vmatpush1.msra.mxu0 %v638
          %1419 = vmatprep.subr.mxu0 %v643
          %1420 = vmatpush1.msra.mxu0 %v642
          %1421 = vmatprep.subr.mxu0 %v647
          %1422 = vmatpush1.msra.mxu0 %v646
          %1423 = vmatprep.subr.mxu0 %v651
          %1424 = vmatpush1.msra.mxu0 %v650
          %1425 = vmatprep.subr.mxu0 %v655
          %1426 = vmatpush1.msra.mxu0 %v654
          %1427 = vmatprep.subr.mxu0 %v659
          %1428 = vmatpush1.msra.mxu0 %v658
          %1429 = vmatprep.subr.mxu0 %v663
          %1430 = vmatpush1.msra.mxu0 %v662
          %1431 = vmatprep.subr.mxu0 %v667
          %1432 = vmatpush1.msra.mxu0 %v666
          %1433 = vmatprep.subr.mxu0 %v671
          %1434 = vmatpush1.msra.mxu0 %v670
          %1435 = vmatprep.subr.mxu0 %v675
          %1436 = vmatpush1.msra.mxu0 %v674
          %1437 = vmatprep.subr.mxu0 %v679
          %1438 = vmatpush1.msra.mxu0 %v678
          %1439 = vmatprep.subr.mxu0 %v683
          %1440 = vmatpush1.msra.mxu0 %v682
          %1441 = vmatprep.subr.mxu0 %v687
          %1442 = vmatpush1.msra.mxu0 %v686
          %1443 = vmatprep.subr.mxu0 %v691
          %1444 = vmatpush1.msra.mxu0 %v690
          %1445 = vmatprep.subr.mxu0 %v695
          %1446 = vmatpush1.msra.mxu0 %v694
          %1447 = vmatprep.subr.mxu0 0.0
          %1448 = vmatpush1.msra.mxu0 0.0
          %1449 = vmatprep.subr.mxu0 0.0
          %1450 = vmatpush1.msra.mxu0 0.0
          %1451 = vmatprep.subr.mxu0 0.0
          %1452 = vmatpush1.msra.mxu0 0.0
          %1453 = vmatprep.subr.mxu0 0.0
          %1454 = vmatpush1.msra.mxu0 0.0
          %1455 = vmatprep.subr.mxu0 0.0
          %1456 = vmatpush1.msra.mxu0 0.0
          %1457 = vmatprep.subr.mxu0 0.0
          %1458 = vmatpush1.msra.mxu0 0.0
          %1459 = vmatprep.subr.mxu0 0.0
          %1460 = vmatpush1.msra.mxu0 0.0
          %1461 = vmatprep.subr.mxu0 0.0
          %1462 = vmatpush1.msra.mxu0 0.0
          %1463 = vmatprep.subr.mxu0 0.0
          %1464 = vmatpush1.msra.mxu0 0.0
          %1465 = vmatprep.subr.mxu0 0.0
          %1466 = vmatpush1.msra.mxu0 0.0
          %1467 = vmatprep.subr.mxu0 0.0
          %1468 = vmatpush1.msra.mxu0 0.0
          %1469 = vmatprep.subr.mxu0 0.0
          %1470 = vmatpush1.msra.mxu0 0.0
          %1471 = vmatprep.subr.mxu0 0.0
          %1472 = vmatpush1.msra.mxu0 0.0
          %1473 = vmatprep.subr.mxu0 0.0
          %1474 = vmatpush1.msra.mxu0 0.0
          %1475 = vmatprep.subr.mxu0 0.0
          %1476 = vmatpush1.msra.mxu0 0.0
          %1477 = vmatprep.subr.mxu0 0.0
          %1478 = vmatpush1.msra.mxu0 0.0
          %1479 = vmatprep.mubr.f32.mxu0 0.0
          %1480 = vmatmul.mubr.f32.gmra.mrb[0].mxu0 %v1407
          %v1481 = vpop.f32.mrb[0].mxu0
          %v1482 = vadd.f32 0.0, %v1481
          %v1483 = vpop.f32.mrb[0].mxu0
          %v1484 = vadd.f32 0.0, %v1483
          %1485 = vdwg.mxu0
          %1486 = vmatprep.subr.mxu0 %v637
          %1487 = vmatpush1.msra.mxu0 %v636
          %1488 = vmatprep.subr.mxu0 %v641
          %1489 = vmatpush1.msra.mxu0 %v640
          %1490 = vmatprep.subr.mxu0 %v645
          %1491 = vmatpush1.msra.mxu0 %v644
          %1492 = vmatprep.subr.mxu0 %v649
          %1493 = vmatpush1.msra.mxu0 %v648
          %1494 = vmatprep.subr.mxu0 %v653
          %1495 = vmatpush1.msra.mxu0 %v652
          %1496 = vmatprep.subr.mxu0 %v657
          %1497 = vmatpush1.msra.mxu0 %v656
          %1498 = vmatprep.subr.mxu0 %v661
          %1499 = vmatpush1.msra.mxu0 %v660
          %1500 = vmatprep.subr.mxu0 %v665
          %1501 = vmatpush1.msra.mxu0 %v664
          %1502 = vmatprep.subr.mxu0 %v669
          %1503 = vmatpush1.msra.mxu0 %v668
          %1504 = vmatprep.subr.mxu0 %v673
          %1505 = vmatpush1.msra.mxu0 %v672
          %1506 = vmatprep.subr.mxu0 %v677
          %1507 = vmatpush1.msra.mxu0 %v676
          %1508 = vmatprep.subr.mxu0 %v681
          %1509 = vmatpush1.msra.mxu0 %v680
          %1510 = vmatprep.subr.mxu0 %v685
          %1511 = vmatpush1.msra.mxu0 %v684
          %1512 = vmatprep.subr.mxu0 %v689
          %1513 = vmatpush1.msra.mxu0 %v688
          %1514 = vmatprep.subr.mxu0 %v693
          %1515 = vmatpush1.msra.mxu0 %v692
          %1516 = vmatprep.subr.mxu0 %v697
          %1517 = vmatpush1.msra.mxu0 %v696
          %1518 = vmatprep.subr.mxu0 0.0
          %1519 = vmatpush1.msra.mxu0 0.0
          %1520 = vmatprep.subr.mxu0 0.0
          %1521 = vmatpush1.msra.mxu0 0.0
          %1522 = vmatprep.subr.mxu0 0.0
          %1523 = vmatpush1.msra.mxu0 0.0
          %1524 = vmatprep.subr.mxu0 0.0
          %1525 = vmatpush1.msra.mxu0 0.0
          %1526 = vmatprep.subr.mxu0 0.0
          %1527 = vmatpush1.msra.mxu0 0.0
          %1528 = vmatprep.subr.mxu0 0.0
          %1529 = vmatpush1.msra.mxu0 0.0
          %1530 = vmatprep.subr.mxu0 0.0
          %1531 = vmatpush1.msra.mxu0 0.0
          %1532 = vmatprep.subr.mxu0 0.0
          %1533 = vmatpush1.msra.mxu0 0.0
          %1534 = vmatprep.subr.mxu0 0.0
          %1535 = vmatpush1.msra.mxu0 0.0
          %1536 = vmatprep.subr.mxu0 0.0
          %1537 = vmatpush1.msra.mxu0 0.0
          %1538 = vmatprep.subr.mxu0 0.0
          %1539 = vmatpush1.msra.mxu0 0.0
          %1540 = vmatprep.subr.mxu0 0.0
          %1541 = vmatpush1.msra.mxu0 0.0
          %1542 = vmatprep.subr.mxu0 0.0
          %1543 = vmatpush1.msra.mxu0 0.0
          %1544 = vmatprep.subr.mxu0 0.0
          %1545 = vmatpush1.msra.mxu0 0.0
          %1546 = vmatprep.subr.mxu0 0.0
          %1547 = vmatpush1.msra.mxu0 0.0
          %1548 = vmatprep.subr.mxu0 0.0
          %1549 = vmatpush1.msra.mxu0 0.0
          %1550 = vmatprep.mubr.f32.mxu0 0.0
          %1551 = vmatmul.mubr.f32.gmra.mrb[0].mxu0 %v1407
          %v1552 = vpop.f32.mrb[0].mxu0
          %v1553 = vadd.f32 0.0, %v1552
          %v1554 = vpop.f32.mrb[0].mxu0
          %v1555 = vadd.f32 0.0, %v1554
          %1556 = vdwg.mxu0
          %v1557 = vadd.f32 %v1411, %v1482
          %v1558 = vadd.f32 %v1412, %v1484
          %v1559 = vadd.f32 %v1413, %v1553
          %v1560 = vadd.f32 %v1414, %v1555
          %v1561 = vxor.u32 %v1557, 2147483648
          %v1562 = vxor.u32 %v1558, 2147483648
          %v1563 = vxor.u32 %v1559, 2147483648
          %v1564 = vmul.f32 %v1561, 1.442695
          %v1565 = vpow.pop %v1564
          %v1566 = vmul.f32 %v1562, 1.442695
          %v1567 = vpow.pop %v1566
          %v1568 = vmul.f32 %v1563, 1.442695
          %v1569 = vpow.pop %v1568
          %v1570 = vadd.f32 %v1565, 1.0
          %v1571 = vadd.f32 %v1567, 1.0
          %v1572 = vadd.f32 %v1569, 1.0
          %v1573 = vrcp.pop %v1570
          %v1574 = vmul.f32 1.0, %v1573
          %v1575 = vrcp.pop %v1571
          %v1576 = vmul.f32 1.0, %v1575
          %v1577 = vrcp.pop %v1572
          %v1578 = vmul.f32 1.0, %v1577
          %v1579 = vtanh.pop %v1560
          %v1580 = vmul.f32 %v1576, %v1405
          %v1581 = vmul.f32 %v1574, %v1579
          %v1582 = vadd.f32 %v1580, %v1581
          %v1583 = vtanh.pop %v1582
          %v1584 = vmul.f32 %v1578, %v1583
          %s1585 = sadd.s32 20, %s700
          %s1586 = smul.addr %s1585, 8
          %s1587 = scalar_lea.vmem [#allocation2], %s1586
          %v1588 = vld [vmem:[%s1587] sm:$0xff]
          %v1589 = vld [vmem:[%s1587 + $0x8] sm:$0xff]
          %v1590 = vld [vmem:[%s1587 + $0x10] sm:$0xff]
          %v1591 = vld [vmem:[%s1587 + $0x18] sm:$0xff]
          %1592 = vmatprep.subr.mxu0 %v635
          %1593 = vmatpush1.msra.mxu0 %v634
          %1594 = vmatprep.subr.mxu0 %v639
          %1595 = vmatpush1.msra.mxu0 %v638
          %1596 = vmatprep.subr.mxu0 %v643
          %1597 = vmatpush1.msra.mxu0 %v642
          %1598 = vmatprep.subr.mxu0 %v647
          %1599 = vmatpush1.msra.mxu0 %v646
          %1600 = vmatprep.subr.mxu0 %v651
          %1601 = vmatpush1.msra.mxu0 %v650
          %1602 = vmatprep.subr.mxu0 %v655
          %1603 = vmatpush1.msra.mxu0 %v654
          %1604 = vmatprep.subr.mxu0 %v659
          %1605 = vmatpush1.msra.mxu0 %v658
          %1606 = vmatprep.subr.mxu0 %v663
          %1607 = vmatpush1.msra.mxu0 %v662
          %1608 = vmatprep.subr.mxu0 %v667
          %1609 = vmatpush1.msra.mxu0 %v666
          %1610 = vmatprep.subr.mxu0 %v671
          %1611 = vmatpush1.msra.mxu0 %v670
          %1612 = vmatprep.subr.mxu0 %v675
          %1613 = vmatpush1.msra.mxu0 %v674
          %1614 = vmatprep.subr.mxu0 %v679
          %1615 = vmatpush1.msra.mxu0 %v678
          %1616 = vmatprep.subr.mxu0 %v683
          %1617 = vmatpush1.msra.mxu0 %v682
          %1618 = vmatprep.subr.mxu0 %v687
          %1619 = vmatpush1.msra.mxu0 %v686
          %1620 = vmatprep.subr.mxu0 %v691
          %1621 = vmatpush1.msra.mxu0 %v690
          %1622 = vmatprep.subr.mxu0 %v695
          %1623 = vmatpush1.msra.mxu0 %v694
          %1624 = vmatprep.subr.mxu0 0.0
          %1625 = vmatpush1.msra.mxu0 0.0
          %1626 = vmatprep.subr.mxu0 0.0
          %1627 = vmatpush1.msra.mxu0 0.0
          %1628 = vmatprep.subr.mxu0 0.0
          %1629 = vmatpush1.msra.mxu0 0.0
          %1630 = vmatprep.subr.mxu0 0.0
          %1631 = vmatpush1.msra.mxu0 0.0
          %1632 = vmatprep.subr.mxu0 0.0
          %1633 = vmatpush1.msra.mxu0 0.0
          %1634 = vmatprep.subr.mxu0 0.0
          %1635 = vmatpush1.msra.mxu0 0.0
          %1636 = vmatprep.subr.mxu0 0.0
          %1637 = vmatpush1.msra.mxu0 0.0
          %1638 = vmatprep.subr.mxu0 0.0
          %1639 = vmatpush1.msra.mxu0 0.0
          %1640 = vmatprep.subr.mxu0 0.0
          %1641 = vmatpush1.msra.mxu0 0.0
          %1642 = vmatprep.subr.mxu0 0.0
          %1643 = vmatpush1.msra.mxu0 0.0
          %1644 = vmatprep.subr.mxu0 0.0
          %1645 = vmatpush1.msra.mxu0 0.0
          %1646 = vmatprep.subr.mxu0 0.0
          %1647 = vmatpush1.msra.mxu0 0.0
          %1648 = vmatprep.subr.mxu0 0.0
          %1649 = vmatpush1.msra.mxu0 0.0
          %1650 = vmatprep.subr.mxu0 0.0
          %1651 = vmatpush1.msra.mxu0 0.0
          %1652 = vmatprep.subr.mxu0 0.0
          %1653 = vmatpush1.msra.mxu0 0.0
          %1654 = vmatprep.subr.mxu0 0.0
          %1655 = vmatpush1.msra.mxu0 0.0
          %1656 = vmatprep.mubr.f32.mxu0 0.0
          %1657 = vmatmul.mubr.f32.gmra.mrb[0].mxu0 %v1584
          %v1658 = vpop.f32.mrb[0].mxu0
          %v1659 = vadd.f32 0.0, %v1658
          %v1660 = vpop.f32.mrb[0].mxu0
          %v1661 = vadd.f32 0.0, %v1660
          %1662 = vdwg.mxu0
          %1663 = vmatprep.subr.mxu0 %v637
          %1664 = vmatpush1.msra.mxu0 %v636
          %1665 = vmatprep.subr.mxu0 %v641
          %1666 = vmatpush1.msra.mxu0 %v640
          %1667 = vmatprep.subr.mxu0 %v645
          %1668 = vmatpush1.msra.mxu0 %v644
          %1669 = vmatprep.subr.mxu0 %v649
          %1670 = vmatpush1.msra.mxu0 %v648
          %1671 = vmatprep.subr.mxu0 %v653
          %1672 = vmatpush1.msra.mxu0 %v652
          %1673 = vmatprep.subr.mxu0 %v657
          %1674 = vmatpush1.msra.mxu0 %v656
          %1675 = vmatprep.subr.mxu0 %v661
          %1676 = vmatpush1.msra.mxu0 %v660
          %1677 = vmatprep.subr.mxu0 %v665
          %1678 = vmatpush1.msra.mxu0 %v664
          %1679 = vmatprep.subr.mxu0 %v669
          %1680 = vmatpush1.msra.mxu0 %v668
          %1681 = vmatprep.subr.mxu0 %v673
          %1682 = vmatpush1.msra.mxu0 %v672
          %1683 = vmatprep.subr.mxu0 %v677
          %1684 = vmatpush1.msra.mxu0 %v676
          %1685 = vmatprep.subr.mxu0 %v681
          %1686 = vmatpush1.msra.mxu0 %v680
          %1687 = vmatprep.subr.mxu0 %v685
          %1688 = vmatpush1.msra.mxu0 %v684
          %1689 = vmatprep.subr.mxu0 %v689
          %1690 = vmatpush1.msra.mxu0 %v688
          %1691 = vmatprep.subr.mxu0 %v693
          %1692 = vmatpush1.msra.mxu0 %v692
          %1693 = vmatprep.subr.mxu0 %v697
          %1694 = vmatpush1.msra.mxu0 %v696
          %1695 = vmatprep.subr.mxu0 0.0
          %1696 = vmatpush1.msra.mxu0 0.0
          %1697 = vmatprep.subr.mxu0 0.0
          %1698 = vmatpush1.msra.mxu0 0.0
          %1699 = vmatprep.subr.mxu0 0.0
          %1700 = vmatpush1.msra.mxu0 0.0
          %1701 = vmatprep.subr.mxu0 0.0
          %1702 = vmatpush1.msra.mxu0 0.0
          %1703 = vmatprep.subr.mxu0 0.0
          %1704 = vmatpush1.msra.mxu0 0.0
          %1705 = vmatprep.subr.mxu0 0.0
          %1706 = vmatpush1.msra.mxu0 0.0
          %1707 = vmatprep.subr.mxu0 0.0
          %1708 = vmatpush1.msra.mxu0 0.0
          %1709 = vmatprep.subr.mxu0 0.0
          %1710 = vmatpush1.msra.mxu0 0.0
          %1711 = vmatprep.subr.mxu0 0.0
          %1712 = vmatpush1.msra.mxu0 0.0
          %1713 = vmatprep.subr.mxu0 0.0
          %1714 = vmatpush1.msra.mxu0 0.0
          %1715 = vmatprep.subr.mxu0 0.0
          %1716 = vmatpush1.msra.mxu0 0.0
          %1717 = vmatprep.subr.mxu0 0.0
          %1718 = vmatpush1.msra.mxu0 0.0
          %1719 = vmatprep.subr.mxu0 0.0
          %1720 = vmatpush1.msra.mxu0 0.0
          %1721 = vmatprep.subr.mxu0 0.0
          %1722 = vmatpush1.msra.mxu0 0.0
          %1723 = vmatprep.subr.mxu0 0.0
          %1724 = vmatpush1.msra.mxu0 0.0
          %1725 = vmatprep.subr.mxu0 0.0
          %1726 = vmatpush1.msra.mxu0 0.0
          %1727 = vmatprep.mubr.f32.mxu0 0.0
          %1728 = vmatmul.mubr.f32.gmra.mrb[0].mxu0 %v1584
          %v1729 = vpop.f32.mrb[0].mxu0
          %v1730 = vadd.f32 0.0, %v1729
          %v1731 = vpop.f32.mrb[0].mxu0
          %v1732 = vadd.f32 0.0, %v1731
          %1733 = vdwg.mxu0
          %v1734 = vadd.f32 %v1588, %v1659
          %v1735 = vadd.f32 %v1589, %v1661
          %v1736 = vadd.f32 %v1590, %v1730
          %v1737 = vadd.f32 %v1591, %v1732
          %v1738 = vxor.u32 %v1734, 2147483648
          %v1739 = vxor.u32 %v1735, 2147483648
          %v1740 = vxor.u32 %v1736, 2147483648
          %v1741 = vmul.f32 %v1738, 1.442695
          %v1742 = vpow.pop %v1741
          %v1743 = vmul.f32 %v1739, 1.442695
          %v1744 = vpow.pop %v1743
          %v1745 = vmul.f32 %v1740, 1.442695
          %v1746 = vpow.pop %v1745
          %v1747 = vadd.f32 %v1742, 1.0
          %v1748 = vadd.f32 %v1744, 1.0
          %v1749 = vadd.f32 %v1746, 1.0
          %v1750 = vrcp.pop %v1747
          %v1751 = vmul.f32 1.0, %v1750
          %v1752 = vrcp.pop %v1748
          %v1753 = vmul.f32 1.0, %v1752
          %v1754 = vrcp.pop %v1749
          %v1755 = vmul.f32 1.0, %v1754
          %v1756 = vtanh.pop %v1737
          %v1757 = vmul.f32 %v1753, %v1582
          %v1758 = vmul.f32 %v1751, %v1756
          %v1759 = vadd.f32 %v1757, %v1758
          %v1760 = vtanh.pop %v1759
          %v1761 = vmul.f32 %v1755, %v1760
          %s1762 = sadd.s32 24, %s700
          %s1763 = smul.addr %s1762, 8
          %s1764 = scalar_lea.vmem [#allocation2], %s1763
          %v1765 = vld [vmem:[%s1764] sm:$0xff]
          %v1766 = vld [vmem:[%s1764 + $0x8] sm:$0xff]
          %v1767 = vld [vmem:[%s1764 + $0x10] sm:$0xff]
          %v1768 = vld [vmem:[%s1764 + $0x18] sm:$0xff]
          %1769 = vmatprep.subr.mxu0 %v635
          %1770 = vmatpush1.msra.mxu0 %v634
          %1771 = vmatprep.subr.mxu0 %v639
          %1772 = vmatpush1.msra.mxu0 %v638
          %1773 = vmatprep.subr.mxu0 %v643
          %1774 = vmatpush1.msra.mxu0 %v642
          %1775 = vmatprep.subr.mxu0 %v647
          %1776 = vmatpush1.msra.mxu0 %v646
          %1777 = vmatprep.subr.mxu0 %v651
          %1778 = vmatpush1.msra.mxu0 %v650
          %1779 = vmatprep.subr.mxu0 %v655
          %1780 = vmatpush1.msra.mxu0 %v654
          %1781 = vmatprep.subr.mxu0 %v659
          %1782 = vmatpush1.msra.mxu0 %v658
          %1783 = vmatprep.subr.mxu0 %v663
          %1784 = vmatpush1.msra.mxu0 %v662
          %1785 = vmatprep.subr.mxu0 %v667
          %1786 = vmatpush1.msra.mxu0 %v666
          %1787 = vmatprep.subr.mxu0 %v671
          %1788 = vmatpush1.msra.mxu0 %v670
          %1789 = vmatprep.subr.mxu0 %v675
          %1790 = vmatpush1.msra.mxu0 %v674
          %1791 = vmatprep.subr.mxu0 %v679
          %1792 = vmatpush1.msra.mxu0 %v678
          %1793 = vmatprep.subr.mxu0 %v683
          %1794 = vmatpush1.msra.mxu0 %v682
          %1795 = vmatprep.subr.mxu0 %v687
          %1796 = vmatpush1.msra.mxu0 %v686
          %1797 = vmatprep.subr.mxu0 %v691
          %1798 = vmatpush1.msra.mxu0 %v690
          %1799 = vmatprep.subr.mxu0 %v695
          %1800 = vmatpush1.msra.mxu0 %v694
          %1801 = vmatprep.subr.mxu0 0.0
          %1802 = vmatpush1.msra.mxu0 0.0
          %1803 = vmatprep.subr.mxu0 0.0
          %1804 = vmatpush1.msra.mxu0 0.0
          %1805 = vmatprep.subr.mxu0 0.0
          %1806 = vmatpush1.msra.mxu0 0.0
          %1807 = vmatprep.subr.mxu0 0.0
          %1808 = vmatpush1.msra.mxu0 0.0
          %1809 = vmatprep.subr.mxu0 0.0
          %1810 = vmatpush1.msra.mxu0 0.0
          %1811 = vmatprep.subr.mxu0 0.0
          %1812 = vmatpush1.msra.mxu0 0.0
          %1813 = vmatprep.subr.mxu0 0.0
          %1814 = vmatpush1.msra.mxu0 0.0
          %1815 = vmatprep.subr.mxu0 0.0
          %1816 = vmatpush1.msra.mxu0 0.0
          %1817 = vmatprep.subr.mxu0 0.0
          %1818 = vmatpush1.msra.mxu0 0.0
          %1819 = vmatprep.subr.mxu0 0.0
          %1820 = vmatpush1.msra.mxu0 0.0
          %1821 = vmatprep.subr.mxu0 0.0
          %1822 = vmatpush1.msra.mxu0 0.0
          %1823 = vmatprep.subr.mxu0 0.0
          %1824 = vmatpush1.msra.mxu0 0.0
          %1825 = vmatprep.subr.mxu0 0.0
          %1826 = vmatpush1.msra.mxu0 0.0
          %1827 = vmatprep.subr.mxu0 0.0
          %1828 = vmatpush1.msra.mxu0 0.0
          %1829 = vmatprep.subr.mxu0 0.0
          %1830 = vmatpush1.msra.mxu0 0.0
          %1831 = vmatprep.subr.mxu0 0.0
          %1832 = vmatpush1.msra.mxu0 0.0
          %1833 = vmatprep.mubr.f32.mxu0 0.0
          %1834 = vmatmul.mubr.f32.gmra.mrb[0].mxu0 %v1761
          %v1835 = vpop.f32.mrb[0].mxu0
          %v1836 = vadd.f32 0.0, %v1835
          %v1837 = vpop.f32.mrb[0].mxu0
          %v1838 = vadd.f32 0.0, %v1837
          %1839 = vdwg.mxu0
          %1840 = vmatprep.subr.mxu0 %v637
          %1841 = vmatpush1.msra.mxu0 %v636
          %1842 = vmatprep.subr.mxu0 %v641
          %1843 = vmatpush1.msra.mxu0 %v640
          %1844 = vmatprep.subr.mxu0 %v645
          %1845 = vmatpush1.msra.mxu0 %v644
          %1846 = vmatprep.subr.mxu0 %v649
          %1847 = vmatpush1.msra.mxu0 %v648
          %1848 = vmatprep.subr.mxu0 %v653
          %1849 = vmatpush1.msra.mxu0 %v652
          %1850 = vmatprep.subr.mxu0 %v657
          %1851 = vmatpush1.msra.mxu0 %v656
          %1852 = vmatprep.subr.mxu0 %v661
          %1853 = vmatpush1.msra.mxu0 %v660
          %1854 = vmatprep.subr.mxu0 %v665
          %1855 = vmatpush1.msra.mxu0 %v664
          %1856 = vmatprep.subr.mxu0 %v669
          %1857 = vmatpush1.msra.mxu0 %v668
          %1858 = vmatprep.subr.mxu0 %v673
          %1859 = vmatpush1.msra.mxu0 %v672
          %1860 = vmatprep.subr.mxu0 %v677
          %1861 = vmatpush1.msra.mxu0 %v676
          %1862 = vmatprep.subr.mxu0 %v681
          %1863 = vmatpush1.msra.mxu0 %v680
          %1864 = vmatprep.subr.mxu0 %v685
          %1865 = vmatpush1.msra.mxu0 %v684
          %1866 = vmatprep.subr.mxu0 %v689
          %1867 = vmatpush1.msra.mxu0 %v688
          %1868 = vmatprep.subr.mxu0 %v693
          %1869 = vmatpush1.msra.mxu0 %v692
          %1870 = vmatprep.subr.mxu0 %v697
          %1871 = vmatpush1.msra.mxu0 %v696
          %1872 = vmatprep.subr.mxu0 0.0
          %1873 = vmatpush1.msra.mxu0 0.0
          %1874 = vmatprep.subr.mxu0 0.0
          %1875 = vmatpush1.msra.mxu0 0.0
          %1876 = vmatprep.subr.mxu0 0.0
          %1877 = vmatpush1.msra.mxu0 0.0
          %1878 = vmatprep.subr.mxu0 0.0
          %1879 = vmatpush1.msra.mxu0 0.0
          %1880 = vmatprep.subr.mxu0 0.0
          %1881 = vmatpush1.msra.mxu0 0.0
          %1882 = vmatprep.subr.mxu0 0.0
          %1883 = vmatpush1.msra.mxu0 0.0
          %1884 = vmatprep.subr.mxu0 0.0
          %1885 = vmatpush1.msra.mxu0 0.0
          %1886 = vmatprep.subr.mxu0 0.0
          %1887 = vmatpush1.msra.mxu0 0.0
          %1888 = vmatprep.subr.mxu0 0.0
          %1889 = vmatpush1.msra.mxu0 0.0
          %1890 = vmatprep.subr.mxu0 0.0
          %1891 = vmatpush1.msra.mxu0 0.0
          %1892 = vmatprep.subr.mxu0 0.0
          %1893 = vmatpush1.msra.mxu0 0.0
          %1894 = vmatprep.subr.mxu0 0.0
          %1895 = vmatpush1.msra.mxu0 0.0
          %1896 = vmatprep.subr.mxu0 0.0
          %1897 = vmatpush1.msra.mxu0 0.0
          %1898 = vmatprep.subr.mxu0 0.0
          %1899 = vmatpush1.msra.mxu0 0.0
          %1900 = vmatprep.subr.mxu0 0.0
          %1901 = vmatpush1.msra.mxu0 0.0
          %1902 = vmatprep.subr.mxu0 0.0
          %1903 = vmatpush1.msra.mxu0 0.0
          %1904 = vmatprep.mubr.f32.mxu0 0.0
          %1905 = vmatmul.mubr.f32.gmra.mrb[0].mxu0 %v1761
          %v1906 = vpop.f32.mrb[0].mxu0
          %v1907 = vadd.f32 0.0, %v1906
          %v1908 = vpop.f32.mrb[0].mxu0
          %v1909 = vadd.f32 0.0, %v1908
          %1910 = vdwg.mxu0
          %v1911 = vadd.f32 %v1765, %v1836
          %v1912 = vadd.f32 %v1766, %v1838
          %v1913 = vadd.f32 %v1767, %v1907
          %v1914 = vadd.f32 %v1768, %v1909
          %v1915 = vxor.u32 %v1911, 2147483648
          %v1916 = vxor.u32 %v1912, 2147483648
          %v1917 = vxor.u32 %v1913, 2147483648
          %v1918 = vmul.f32 %v1915, 1.442695
          %v1919 = vpow.pop %v1918
          %v1920 = vmul.f32 %v1916, 1.442695
          %v1921 = vpow.pop %v1920
          %v1922 = vmul.f32 %v1917, 1.442695
          %v1923 = vpow.pop %v1922
          %v1924 = vadd.f32 %v1919, 1.0
          %v1925 = vadd.f32 %v1921, 1.0
          %v1926 = vadd.f32 %v1923, 1.0
          %v1927 = vrcp.pop %v1924
          %v1928 = vmul.f32 1.0, %v1927
          %v1929 = vrcp.pop %v1925
          %v1930 = vmul.f32 1.0, %v1929
          %v1931 = vrcp.pop %v1926
          %v1932 = vmul.f32 1.0, %v1931
          %v1933 = vtanh.pop %v1914
          %v1934 = vmul.f32 %v1930, %v1759
          %v1935 = vmul.f32 %v1928, %v1933
          %v1936 = vadd.f32 %v1934, %v1935
          %v1937 = vtanh.pop %v1936
          %v1938 = vmul.f32 %v1932, %v1937
          %s1939 = sadd.s32 28, %s700
          %s1940 = smul.addr %s1939, 8
          %s1941 = scalar_lea.vmem [#allocation2], %s1940
          %v1942 = vld [vmem:[%s1941] sm:$0xff]
          %v1943 = vld [vmem:[%s1941 + $0x8] sm:$0xff]
          %v1944 = vld [vmem:[%s1941 + $0x10] sm:$0xff]
          %v1945 = vld [vmem:[%s1941 + $0x18] sm:$0xff]
          %1946 = vmatprep.subr.mxu0 %v635
          %1947 = vmatpush1.msra.mxu0 %v634
          %1948 = vmatprep.subr.mxu0 %v639
          %1949 = vmatpush1.msra.mxu0 %v638
          %1950 = vmatprep.subr.mxu0 %v643
          %1951 = vmatpush1.msra.mxu0 %v642
          %1952 = vmatprep.subr.mxu0 %v647
          %1953 = vmatpush1.msra.mxu0 %v646
          %1954 = vmatprep.subr.mxu0 %v651
          %1955 = vmatpush1.msra.mxu0 %v650
          %1956 = vmatprep.subr.mxu0 %v655
          %1957 = vmatpush1.msra.mxu0 %v654
          %1958 = vmatprep.subr.mxu0 %v659
          %1959 = vmatpush1.msra.mxu0 %v658
          %1960 = vmatprep.subr.mxu0 %v663
          %1961 = vmatpush1.msra.mxu0 %v662
          %1962 = vmatprep.subr.mxu0 %v667
          %1963 = vmatpush1.msra.mxu0 %v666
          %1964 = vmatprep.subr.mxu0 %v671
          %1965 = vmatpush1.msra.mxu0 %v670
          %1966 = vmatprep.subr.mxu0 %v675
          %1967 = vmatpush1.msra.mxu0 %v674
          %1968 = vmatprep.subr.mxu0 %v679
          %1969 = vmatpush1.msra.mxu0 %v678
          %1970 = vmatprep.subr.mxu0 %v683
          %1971 = vmatpush1.msra.mxu0 %v682
          %1972 = vmatprep.subr.mxu0 %v687
          %1973 = vmatpush1.msra.mxu0 %v686
          %1974 = vmatprep.subr.mxu0 %v691
          %1975 = vmatpush1.msra.mxu0 %v690
          %1976 = vmatprep.subr.mxu0 %v695
          %1977 = vmatpush1.msra.mxu0 %v694
          %1978 = vmatprep.subr.mxu0 0.0
          %1979 = vmatpush1.msra.mxu0 0.0
          %1980 = vmatprep.subr.mxu0 0.0
          %1981 = vmatpush1.msra.mxu0 0.0
          %1982 = vmatprep.subr.mxu0 0.0
          %1983 = vmatpush1.msra.mxu0 0.0
          %1984 = vmatprep.subr.mxu0 0.0
          %1985 = vmatpush1.msra.mxu0 0.0
          %1986 = vmatprep.subr.mxu0 0.0
          %1987 = vmatpush1.msra.mxu0 0.0
          %1988 = vmatprep.subr.mxu0 0.0
          %1989 = vmatpush1.msra.mxu0 0.0
          %1990 = vmatprep.subr.mxu0 0.0
          %1991 = vmatpush1.msra.mxu0 0.0
          %1992 = vmatprep.subr.mxu0 0.0
          %1993 = vmatpush1.msra.mxu0 0.0
          %1994 = vmatprep.subr.mxu0 0.0
          %1995 = vmatpush1.msra.mxu0 0.0
          %1996 = vmatprep.subr.mxu0 0.0
          %1997 = vmatpush1.msra.mxu0 0.0
          %1998 = vmatprep.subr.mxu0 0.0
          %1999 = vmatpush1.msra.mxu0 0.0
          %2000 = vmatprep.subr.mxu0 0.0
          %2001 = vmatpush1.msra.mxu0 0.0
          %2002 = vmatprep.subr.mxu0 0.0
          %2003 = vmatpush1.msra.mxu0 0.0
          %2004 = vmatprep.subr.mxu0 0.0
          %2005 = vmatpush1.msra.mxu0 0.0
          %2006 = vmatprep.subr.mxu0 0.0
          %2007 = vmatpush1.msra.mxu0 0.0
          %2008 = vmatprep.subr.mxu0 0.0
          %2009 = vmatpush1.msra.mxu0 0.0
          %2010 = vmatprep.mubr.f32.mxu0 0.0
          %2011 = vmatmul.mubr.f32.gmra.mrb[0].mxu0 %v1938
          %v2012 = vpop.f32.mrb[0].mxu0
          %v2013 = vadd.f32 0.0, %v2012
          %v2014 = vpop.f32.mrb[0].mxu0
          %v2015 = vadd.f32 0.0, %v2014
          %2016 = vdwg.mxu0
          %2017 = vmatprep.subr.mxu0 %v637
          %2018 = vmatpush1.msra.mxu0 %v636
          %2019 = vmatprep.subr.mxu0 %v641
          %2020 = vmatpush1.msra.mxu0 %v640
          %2021 = vmatprep.subr.mxu0 %v645
          %2022 = vmatpush1.msra.mxu0 %v644
          %2023 = vmatprep.subr.mxu0 %v649
          %2024 = vmatpush1.msra.mxu0 %v648
          %2025 = vmatprep.subr.mxu0 %v653
          %2026 = vmatpush1.msra.mxu0 %v652
          %2027 = vmatprep.subr.mxu0 %v657
          %2028 = vmatpush1.msra.mxu0 %v656
          %2029 = vmatprep.subr.mxu0 %v661
          %2030 = vmatpush1.msra.mxu0 %v660
          %2031 = vmatprep.subr.mxu0 %v665
          %2032 = vmatpush1.msra.mxu0 %v664
          %2033 = vmatprep.subr.mxu0 %v669
          %2034 = vmatpush1.msra.mxu0 %v668
          %2035 = vmatprep.subr.mxu0 %v673
          %2036 = vmatpush1.msra.mxu0 %v672
          %2037 = vmatprep.subr.mxu0 %v677
          %2038 = vmatpush1.msra.mxu0 %v676
          %2039 = vmatprep.subr.mxu0 %v681
          %2040 = vmatpush1.msra.mxu0 %v680
          %2041 = vmatprep.subr.mxu0 %v685
          %2042 = vmatpush1.msra.mxu0 %v684
          %2043 = vmatprep.subr.mxu0 %v689
          %2044 = vmatpush1.msra.mxu0 %v688
          %2045 = vmatprep.subr.mxu0 %v693
          %2046 = vmatpush1.msra.mxu0 %v692
          %2047 = vmatprep.subr.mxu0 %v697
          %2048 = vmatpush1.msra.mxu0 %v696
          %2049 = vmatprep.subr.mxu0 0.0
          %2050 = vmatpush1.msra.mxu0 0.0
          %2051 = vmatprep.subr.mxu0 0.0
          %2052 = vmatpush1.msra.mxu0 0.0
          %2053 = vmatprep.subr.mxu0 0.0
          %2054 = vmatpush1.msra.mxu0 0.0
          %2055 = vmatprep.subr.mxu0 0.0
          %2056 = vmatpush1.msra.mxu0 0.0
          %2057 = vmatprep.subr.mxu0 0.0
          %2058 = vmatpush1.msra.mxu0 0.0
          %2059 = vmatprep.subr.mxu0 0.0
          %2060 = vmatpush1.msra.mxu0 0.0
          %2061 = vmatprep.subr.mxu0 0.0
          %2062 = vmatpush1.msra.mxu0 0.0
          %2063 = vmatprep.subr.mxu0 0.0
          %2064 = vmatpush1.msra.mxu0 0.0
          %2065 = vmatprep.subr.mxu0 0.0
          %2066 = vmatpush1.msra.mxu0 0.0
          %2067 = vmatprep.subr.mxu0 0.0
          %2068 = vmatpush1.msra.mxu0 0.0
          %2069 = vmatprep.subr.mxu0 0.0
          %2070 = vmatpush1.msra.mxu0 0.0
          %2071 = vmatprep.subr.mxu0 0.0
          %2072 = vmatpush1.msra.mxu0 0.0
          %2073 = vmatprep.subr.mxu0 0.0
          %2074 = vmatpush1.msra.mxu0 0.0
          %2075 = vmatprep.subr.mxu0 0.0
          %2076 = vmatpush1.msra.mxu0 0.0
          %2077 = vmatprep.subr.mxu0 0.0
          %2078 = vmatpush1.msra.mxu0 0.0
          %2079 = vmatprep.subr.mxu0 0.0
          %2080 = vmatpush1.msra.mxu0 0.0
          %2081 = vmatprep.mubr.f32.mxu0 0.0
          %2082 = vmatmul.mubr.f32.gmra.mrb[0].mxu0 %v1938
          %v2083 = vpop.f32.mrb[0].mxu0
          %v2084 = vadd.f32 0.0, %v2083
          %v2085 = vpop.f32.mrb[0].mxu0
          %v2086 = vadd.f32 0.0, %v2085
          %2087 = vdwg.mxu0
          %v2088 = vadd.f32 %v1942, %v2013
          %v2089 = vadd.f32 %v1943, %v2015
          %v2090 = vadd.f32 %v1944, %v2084
          %v2091 = vadd.f32 %v1945, %v2086
          %v2092 = vxor.u32 %v2088, 2147483648
          %v2093 = vxor.u32 %v2089, 2147483648
          %v2094 = vxor.u32 %v2090, 2147483648
          %v2095 = vmul.f32 %v2092, 1.442695
          %v2096 = vpow.pop %v2095
          %v2097 = vmul.f32 %v2093, 1.442695
          %v2098 = vpow.pop %v2097
          %v2099 = vmul.f32 %v2094, 1.442695
          %v2100 = vpow.pop %v2099
          %v2101 = vadd.f32 %v2096, 1.0
          %v2102 = vadd.f32 %v2098, 1.0
          %v2103 = vadd.f32 %v2100, 1.0
          %v2104 = vrcp.pop %v2101
          %v2105 = vmul.f32 1.0, %v2104
          %v2106 = vrcp.pop %v2102
          %v2107 = vmul.f32 1.0, %v2106
          %v2108 = vrcp.pop %v2103
          %v2109 = vmul.f32 1.0, %v2108
          %v2110 = vtanh.pop %v2091
          %v2111 = vmul.f32 %v2107, %v1936
          %v2112 = vmul.f32 %v2105, %v2110
          %v2113 = vadd.f32 %v2111, %v2112
          %v2114 = vtanh.pop %v2113
          %v2115 = vmul.f32 %v2109, %v2114
          %2116 = vst [vmem:[#allocation3] sm:$0xff] %v2115
          %2117 = vst [vmem:[#allocation4] sm:$0xff] %v2113
        $region60: #{tpu_custom_call.1} parent=43 // pred_fallthru
          _
        %p2118 = scmp.eq.s32.totalorder %s24, 2
        // Predicated region
        $region61: #{tpu_custom_call.1} parent=43 // pred_check
          %p2119 = pneg %p2118
        $region62: #{tpu_custom_call.1} parent=43 // pred_check_branch
          %2121 = sbr.rel (%p2119) target = $region64
        $region63: #{tpu_custom_call.1} parent=43 // pred_region
          %v2122 = vld [vmem:[#allocation3] sm:$0xff]
          %v2123 = vld [vmem:[%s4] sm:$0xff]
          %v2124 = vld [vmem:[%s4 + $0x8] sm:$0xff]
          %v2125 = vld [vmem:[%s4 + $0x10] sm:$0xff]
          %v2126 = vld [vmem:[%s4 + $0x18] sm:$0xff]
          %v2127 = vld [vmem:[%s4 + $0x20] sm:$0xff]
          %v2128 = vld [vmem:[%s4 + $0x28] sm:$0xff]
          %v2129 = vld [vmem:[%s4 + $0x30] sm:$0xff]
          %v2130 = vld [vmem:[%s4 + $0x38] sm:$0xff]
          %v2131 = vld [vmem:[%s4 + $0x40] sm:$0xff]
          %v2132 = vld [vmem:[%s4 + $0x48] sm:$0xff]
          %v2133 = vld [vmem:[%s4 + $0x50] sm:$0xff]
          %v2134 = vld [vmem:[%s4 + $0x58] sm:$0xff]
          %v2135 = vld [vmem:[%s4 + $0x60] sm:$0xff]
          %v2136 = vld [vmem:[%s4 + $0x68] sm:$0xff]
          %v2137 = vld [vmem:[%s4 + $0x70] sm:$0xff]
          %v2138 = vld [vmem:[%s4 + $0x78] sm:$0xff]
          %v2139 = vld [vmem:[%s5] sm:$0x1]
          %v2141 = vlaneseq
          %v2142 = vshrl.u32 %v2141, 7
          %v2143 = vsub.s32 0, %v2142
          %v2144 = vrot.slane %v2139, %v2143
          %2146 = vmatprep.subr.mxu0 0.0
          %2147 = vmatpush1.msra.mxu0 %v2123
          %2148 = vmatprep.subr.mxu0 0.0
          %2149 = vmatpush1.msra.mxu0 %v2124
          %2150 = vmatprep.subr.mxu0 0.0
          %2151 = vmatpush1.msra.mxu0 %v2125
          %2152 = vmatprep.subr.mxu0 0.0
          %2153 = vmatpush1.msra.mxu0 %v2126
          %2154 = vmatprep.subr.mxu0 0.0
          %2155 = vmatpush1.msra.mxu0 %v2127
          %2156 = vmatprep.subr.mxu0 0.0
          %2157 = vmatpush1.msra.mxu0 %v2128
          %2158 = vmatprep.subr.mxu0 0.0
          %2159 = vmatpush1.msra.mxu0 %v2129
          %2160 = vmatprep.subr.mxu0 0.0
          %2161 = vmatpush1.msra.mxu0 %v2130
          %2162 = vmatprep.subr.mxu0 0.0
          %2163 = vmatpush1.msra.mxu0 %v2131
          %2164 = vmatprep.subr.mxu0 0.0
          %2165 = vmatpush1.msra.mxu0 %v2132
          %2166 = vmatprep.subr.mxu0 0.0
          %2167 = vmatpush1.msra.mxu0 %v2133
          %2168 = vmatprep.subr.mxu0 0.0
          %2169 = vmatpush1.msra.mxu0 %v2134
          %2170 = vmatprep.subr.mxu0 0.0
          %2171 = vmatpush1.msra.mxu0 %v2135
          %2172 = vmatprep.subr.mxu0 0.0
          %2173 = vmatpush1.msra.mxu0 %v2136
          %2174 = vmatprep.subr.mxu0 0.0
          %2175 = vmatpush1.msra.mxu0 %v2137
          %2176 = vmatprep.subr.mxu0 0.0
          %2177 = vmatpush1.msra.mxu0 %v2138
          %2178 = vmatprep.subr.mxu0 0.0
          %2179 = vmatpush1.msra.mxu0 0.0
          %2180 = vmatprep.subr.mxu0 0.0
          %2181 = vmatpush1.msra.mxu0 0.0
          %2182 = vmatprep.subr.mxu0 0.0
          %2183 = vmatpush1.msra.mxu0 0.0
          %2184 = vmatprep.subr.mxu0 0.0
          %2185 = vmatpush1.msra.mxu0 0.0
          %2186 = vmatprep.subr.mxu0 0.0
          %2187 = vmatpush1.msra.mxu0 0.0
          %2188 = vmatprep.subr.mxu0 0.0
          %2189 = vmatpush1.msra.mxu0 0.0
          %2190 = vmatprep.subr.mxu0 0.0
          %2191 = vmatpush1.msra.mxu0 0.0
          %2192 = vmatprep.subr.mxu0 0.0
          %2193 = vmatpush1.msra.mxu0 0.0
          %2194 = vmatprep.subr.mxu0 0.0
          %2195 = vmatpush1.msra.mxu0 0.0
          %2196 = vmatprep.subr.mxu0 0.0
          %2197 = vmatpush1.msra.mxu0 0.0
          %2198 = vmatprep.subr.mxu0 0.0
          %2199 = vmatpush1.msra.mxu0 0.0
          %2200 = vmatprep.subr.mxu0 0.0
          %2201 = vmatpush1.msra.mxu0 0.0
          %2202 = vmatprep.subr.mxu0 0.0
          %2203 = vmatpush1.msra.mxu0 0.0
          %2204 = vmatprep.subr.mxu0 0.0
          %2205 = vmatpush1.msra.mxu0 0.0
          %2206 = vmatprep.subr.mxu0 0.0
          %2207 = vmatpush1.msra.mxu0 0.0
          %2208 = vmatprep.subr.mxu0 0.0
          %2209 = vmatpush1.msra.mxu0 0.0
          %2210 = vmatprep.mubr.f32.mxu0 0.0
          %2211 = vmatmul.mubr.f32.gmra.mrb[0].mxu0 %v2122
          %v2212 = vpop.f32.mrb[0].mxu0
          %v2213 = vadd.f32 %v2144, %v2212
          %v2214 = vpop.f32.mrb[0].mxu0
          %2215 = vdwg.mxu0
          %2216 = vst [vmem:[#allocation8] sm:$0xff] %v2213
        $region64: #{tpu_custom_call.1} parent=43 // pred_fallthru
          _
        // Predicated region
        $region65: #{tpu_custom_call.1} parent=43 // pred_check
          %p2217 = pneg %p182
        $region66: #{tpu_custom_call.1} parent=43 // pred_check_branch
          %2219 = sbr.rel (%p2217) target = $region68
        $region67: #{tpu_custom_call.1} parent=43 // pred_region
          %s2221 = ssub.s32 128, 128
          %2222 = vsyncadd [#allocation7], %s2221
          %s2223 = smul.addr %s23, 128
          %s2224 = scalar_lea.hbm %s6, %s2223
          %s2226 = sshll.u32 [#allocation8], 4
          %s2227 = int_to_ptr.vmem [resolvable:$true] %s2226
          %2229 = dma.vmem_to_hbm [thread:$0]  %s2227, 128, %s2224, [#allocation7]
        $region68: #{tpu_custom_call.1} parent=43 // pred_fallthru
          _
        // Predicated region
        $region69: #{tpu_custom_call.1} parent=43 // pred_check
          %p2230 = pneg %p182
        $region70: #{tpu_custom_call.1} parent=43 // pred_check_branch
          %2232 = sbr.rel (%p2230) target = $region72
        $region71: #{tpu_custom_call.1} parent=43 // pred_region
          %2233 = dma.done [#allocation7], 128
        $region72: #{tpu_custom_call.1} parent=43 // pred_fallthru
          _
      $region44: #{tpu_custom_call.1} parent=5 // pred_fallthru
        _
      %p2234 = scmp.le.s32.totalorder 2, %s14
      // Predicated region
      $region73: #{tpu_custom_call.1} parent=5 // pred_check
        %p2235 = pneg %p2234
      $region74: #{tpu_custom_call.1} parent=5 // pred_check_branch
        %2237 = sbr.rel (%p2235) target = $region76
      $region75: #{tpu_custom_call.1} parent=5 // pred_region
        %s2238 = ssub.s32 %s14, 2
      $region76: #{tpu_custom_call.1} parent=5 // pred_fallthru
        _
    $region6: #{tpu_custom_call.1} parent=1 // loop_footer
      %s18 = sadd.s32 1, %s14
    $region7: #{tpu_custom_call.1} parent=1 // loop_footer_branch
      %13 = sbr.rel target = $region3
    $region8: #{tpu_custom_call.1} parent=1 // loop_exit
      _
    %2239 = vsyncpa [#allocation6], 1
    %s2240 = scalar_lea.sflag [#allocation6], 1
    %2241 = vsyncpa %s2240, 1
    %2242 = vsyncpa [#allocation7], 1
    %s2243 = scalar_lea.sflag [#allocation7], 1
    %2244 = vsyncpa %s2243, 1

</llo_original>
